<compile_context>
chip_gen: v7x
topology: tpu7x:2x2x1
jax: 0.10.0
libtpu: 0.0.40
codegen_flags: <defaults>
</compile_context>

<pallas_src>
import jax
import jax.numpy as jnp
from jax.experimental import pallas as pl
from jax.experimental.pallas import tpu as pltpu

NUM_CONES = 32
FEAT = 512
EPS = 1e-8


# ---------------------------------------------------------------------------
# Fused kernel: encoder -> max-pool -> decoder -> feature_mapper -> cone SDF.
# ---------------------------------------------------------------------------
def _conenet_fused_kernel(pts_ref, q_ref, w_enc_ref, b_enc_ref,
                          w_dec_hbm, b_dec_ref, w_map_hbm, b_map_ref,
                          mult_ref, add_ref,
                          sdf_ref, cone_ref,
                          w_dec_vmem, w_map_vmem, dma_sem):
    K = NUM_CONES

    # Kick off decoder / mapper weight fetches immediately so the HBM DMA
    # overlaps with the encoder + max-pool (which only need pts + w_enc).
    dec_cp = pltpu.make_async_copy(w_dec_hbm, w_dec_vmem, dma_sem.at[0])
    map_cp = pltpu.make_async_copy(w_map_hbm, w_map_vmem, dma_sem.at[1])
    dec_cp.start()
    map_cp.start()

    # ---- encoder: per-point linear + ReLU + global max-pool (lane-dense) ---
    pts = pts_ref[...]                                # (N, 3)   f32
    w_enc = w_enc_ref[...]                            # (3, 512) f32
    # contraction dim is 3 -> VPU broadcast-FMAs, not a nearly-empty MXU op
    h = (pts[:, 0:1] * w_enc[0:1, :]
         + pts[:, 1:2] * w_enc[1:2, :]
         + pts[:, 2:3] * w_enc[2:3, :])               # (N, 512) full lanes
    h = jnp.maximum(h + b_enc_ref[...], 0.0)
    g = jnp.max(h, axis=0, keepdims=True)             # (1, 512) global feature

    # ---- decoder: f32 activations x (bf16 weights upcast to f32) -----------
    dec_cp.wait()
    w_dec = w_dec_vmem[...].astype(jnp.float32)       # (512, 512)
    d = jnp.dot(g, w_dec, preferred_element_type=jnp.float32) + b_dec_ref[...]
    d = jnp.maximum(d, 0.0)                           # (1, 512)

    # ---- feature mapper + sigmoid/affine (columns in j*K + k order) --------
    map_cp.wait()
    w_map = w_map_vmem[...].astype(jnp.float32)       # (512, 8K)
    m = jnp.dot(d, w_map, preferred_element_type=jnp.float32) + b_map_ref[...]
    cone = jax.nn.sigmoid(m) * mult_ref[...] + add_ref[...]      # (1, 8K)

    cx = cone[:, 0 * K:1 * K]                         # each (1, K)
    cy = cone[:, 1 * K:2 * K]
    cz = cone[:, 2 * K:3 * K]
    r  = cone[:, 3 * K:4 * K]
    hh = cone[:, 4 * K:5 * K]
    ax = cone[:, 5 * K:6 * K]
    ay = cone[:, 6 * K:7 * K]
    az = cone[:, 7 * K:8 * K]

    # cone-parameter output, param-major (8, K); wrapper transposes to (K, 8).
    cone_ref[0:1, :] = cx
    cone_ref[1:2, :] = cy
    cone_ref[2:3, :] = cz
    cone_ref[3:4, :] = r
    cone_ref[4:5, :] = hh
    cone_ref[5:6, :] = ax
    cone_ref[6:7, :] = ay
    cone_ref[7:8, :] = az

    # ---- analytic cone SDF, computed directly in caller layout (Nq, K) -----
    inv_n = jax.lax.rsqrt(ax * ax + ay * ay + az * az + EPS)     # (1, K)
    axn, ayn, azn = ax * inv_n, ay * inv_n, az * inv_n           # unit axis
    inv_h = pl.reciprocal(hh + EPS, approx=True)                 # (1, K)
    r_over_h = r * inv_h                                         # hoisted

    q = q_ref[...]                                    # (Nq, 3) f32
    dx = q[:, 0:1] - cx                               # (Nq, K)
    dy = q[:, 1:2] - cy
    dz = q[:, 2:3] - cz
    t = dx * axn + dy * ayn + dz * azn                # axial coordinate
    d2 = dx * dx + dy * dy + dz * dz
    radial = jnp.sqrt(jnp.maximum(d2 - t * t, 0.0))
    #   r * (1 - t / (h + eps))  ==  r - r_over_h * t   (reciprocal hoisted)
    sdf = jnp.maximum(radial - (r - r_over_h * t), jnp.abs(t) - hh)
    sdf_ref[...] = sdf                                # (Nq, K) caller layout


# ---------------------------------------------------------------------------
# Parameter construction / packing.
# ---------------------------------------------------------------------------
def init_params(key):
    """Random stand-in parameters, stored in `x @ W + b` orientation
    (i.e. the transpose of the torch nn.Linear weight)."""
    k1, k2, k3, k4, k5, k6 = jax.random.split(key, 6)
    s = 0.05
    return dict(
        w_enc=jax.random.normal(k1, (3, FEAT), jnp.float32) * s,
        b_enc=jax.random.normal(k2, (FEAT,), jnp.float32) * s,
        w_dec=jax.random.normal(k3, (FEAT, FEAT), jnp.float32) * s,
        b_dec=jax.random.normal(k4, (FEAT,), jnp.float32) * s,
        w_map=jax.random.normal(k5, (FEAT, NUM_CONES * 8), jnp.float32) * s,
        b_map=jax.random.normal(k6, (NUM_CONES * 8,), jnp.float32) * s,
    )


def pack_params(p):
    """One-time repack into the kernel layout:
       * decoder/mapper weights stored bf16 (halved weight DMA); the kernel
         upcasts them to f32 so activations/accumulation stay f32,
       * feature-mapper columns reordered from torch order (k*8 + j) to
         param-major order (j*K + k) so per-parameter slices are contiguous
         lane slices of the (1, 256) mapper row,
       * biases / affine constants as (1, n) lane-dense rows."""
    K = NUM_CONES
    mult8 = jnp.array([1.0, 1.0, 1.0, 0.1, 0.1, 2.0, 2.0, 2.0], jnp.float32)
    add8 = jnp.array([-0.5, -0.5, -0.5, 0.0, 0.0, -1.0, -1.0, -1.0],
                     jnp.float32)
    # column c = k*8 + j  ->  column c' = j*K + k
    w_map_r = (p["w_map"].reshape(FEAT, K, 8).transpose(0, 2, 1)
               .reshape(FEAT, 8 * K))
    b_map_r = p["b_map"].reshape(K, 8).T.reshape(1, 8 * K)
    return dict(
        w_enc=p["w_enc"],                               # (3, 512)   f32
        b_enc=p["b_enc"].reshape(1, FEAT),              # (1, 512)   f32
        w_dec=p["w_dec"].astype(jnp.bfloat16),          # (512, 512) bf16
        b_dec=p["b_dec"].reshape(1, FEAT),              # (1, 512)   f32
        w_map=w_map_r.astype(jnp.bfloat16),             # (512, 256) bf16
        b_map=b_map_r,                                  # (1, 256)   f32
        mult=jnp.repeat(mult8, K).reshape(1, 8 * K),    # (1, 256)
        add=jnp.repeat(add8, K).reshape(1, 8 * K),      # (1, 256)
    )


# ---------------------------------------------------------------------------
# Forward wrapper (single pallas_call; inputs/outputs in caller layout).
# ---------------------------------------------------------------------------
def cone_net_forward(voxel_points, query_points, packed):
    n_pts = voxel_points.shape[0]
    nq = query_points.shape[0]
    K = NUM_CONES

    args = (voxel_points, query_points,
            packed["w_enc"], packed["b_enc"],
            packed["w_dec"], packed["b_dec"],
            packed["w_map"], packed["b_map"],
            packed["mult"], packed["add"])

    vmem = pl.BlockSpec(memory_space=pltpu.MemorySpace.VMEM)
    hbm = pl.BlockSpec(memory_space=pl.ANY)     # manual DMA inside the kernel
    in_specs = [vmem, vmem, vmem, vmem, hbm, vmem, hbm, vmem, vmem, vmem]

    flops = (2 * 3 * FEAT * n_pts          # encoder FMAs
             + 2 * FEAT * FEAT             # decoder GEMV
             + 2 * FEAT * 8 * K            # feature-mapper GEMV
             + 25 * K * nq)                # SDF elementwise
    transcendentals = 8 * K + 2 * K + K * nq
    bytes_accessed = int(sum(a.size * a.dtype.itemsize for a in args)
                         + nq * K * 4 + 8 * K * 4)

    sdf, cone8 = pl.pallas_call(
        _conenet_fused_kernel,
        out_shape=(jax.ShapeDtypeStruct((nq, K), jnp.float32),   # caller layout
                   jax.ShapeDtypeStruct((8, K), jnp.float32)),
        in_specs=in_specs,
        out_specs=(vmem, vmem),
        scratch_shapes=[pltpu.VMEM((FEAT, FEAT), jnp.bfloat16),
                        pltpu.VMEM((FEAT, 8 * K), jnp.bfloat16),
                        pltpu.SemaphoreType.DMA((2,))],
        cost_estimate=pl.CostEstimate(flops=int(flops),
                                      transcendentals=int(transcendentals),
                                      bytes_accessed=bytes_accessed),
    )(*args)

    # (8, K) -> (K, 8): 1 KiB transpose kept in the wrapper; all large-tensor
    # relayouts (input transposes, (K,Nq)->(Nq,K) SDF transpose) are gone.
    cone_params = cone8.T
    return sdf, cone_params


# ---------------------------------------------------------------------------
# Pure-jnp reference (same packed weights, exact divide instead of approx).
# ---------------------------------------------------------------------------
def cone_net_reference(voxel_points, query_points, packed):
    K = NUM_CONES
    w_dec = packed["w_dec"].astype(jnp.float32)
    w_map = packed["w_map"].astype(jnp.float32)
    h = jnp.maximum(voxel_points @ packed["w_enc"] + packed["b_enc"], 0.0)
    g = jnp.max(h, axis=0, keepdims=True)
    d = jnp.maximum(g @ w_dec + packed["b_dec"], 0.0)
    m = d @ w_map + packed["b_map"]
    cone = jax.nn.sigmoid(m) * packed["mult"] + packed["add"]    # (1, 8K)
    cone8 = cone.reshape(8, K)                                   # [param, cone]
    cx, cy, cz, r, hh, ax, ay, az = [cone8[j] for j in range(8)]
    inv_n = 1.0 / jnp.sqrt(ax * ax + ay * ay + az * az + EPS)
    ax, ay, az = ax * inv_n, ay * inv_n, az * inv_n
    q = query_points
    dx = q[:, 0:1] - cx[None, :]
    dy = q[:, 1:2] - cy[None, :]
    dz = q[:, 2:3] - cz[None, :]
    t = dx * ax + dy * ay + dz * az
    d2 = dx * dx + dy * dy + dz * dz
    radial = jnp.sqrt(jnp.maximum(d2 - t * t, 0.0))
    sdf = jnp.maximum(radial - r * (1.0 - t / (hh + EPS)), jnp.abs(t) - hh)
    return sdf, cone8.T


if __name__ == "__main__":
    key = jax.random.PRNGKey(0)
    k_vox, k_qry, k_par = jax.random.split(key, 3)

    voxel_data = jax.random.uniform(k_vox, (64, 3), jnp.float32,
                                    minval=-0.5, maxval=0.5)
    query_points = jax.random.uniform(k_qry, (128, 3), jnp.float32,
                                      minval=-0.5, maxval=0.5)
    packed = pack_params(init_params(k_par))

    fwd = jax.jit(cone_net_forward)
    cone_sdf, cone_params = fwd(voxel_data, query_points, packed)
    jax.block_until_ready((cone_sdf, cone_params))

    assert cone_sdf.shape == (128, NUM_CONES)
    assert cone_params.shape == (NUM_CONES, 8)
    assert bool(jnp.all(jnp.isfinite(cone_sdf)))
    assert bool(jnp.all(jnp.isfinite(cone_params)))

    ref_sdf, ref_params = cone_net_reference(voxel_data, query_points, packed)
    assert bool(jnp.allclose(cone_sdf, ref_sdf, rtol=1e-2, atol=1e-2))
    assert bool(jnp.allclose(cone_params, ref_params, rtol=1e-2, atol=1e-2))

    print("KERNEL_OK")
</pallas_src>

<mosaic_0001>
module attributes {stable_mosaic.version = 11 : i64} {
  func.func @_conenet_fused_kernel(%arg0: memref<64x3xf32, #tpu.memory_space<vmem>>, %arg1: memref<128x3xf32, #tpu.memory_space<vmem>>, %arg2: memref<3x512xf32, #tpu.memory_space<vmem>>, %arg3: memref<1x512xf32, #tpu.memory_space<vmem>>, %arg4: memref<512x512xbf16, #tpu.memory_space<any>>, %arg5: memref<1x512xf32, #tpu.memory_space<vmem>>, %arg6: memref<512x256xbf16, #tpu.memory_space<any>>, %arg7: memref<1x256xf32, #tpu.memory_space<vmem>>, %arg8: memref<1x256xf32, #tpu.memory_space<vmem>>, %arg9: memref<1x256xf32, #tpu.memory_space<vmem>>, %arg10: memref<128x32xf32, #tpu.memory_space<vmem>>, %arg11: memref<8x32xf32, #tpu.memory_space<vmem>>, %arg12: memref<512x512xbf16, #tpu.memory_space<vmem>>, %arg13: memref<512x256xbf16, #tpu.memory_space<vmem>>, %arg14: memref<2x!tpu.dma_semaphore, #tpu.memory_space<semaphore_mem>>) attributes {dimension_semantics = [], scalar_prefetch = 0 : i64, scratch_operands = 3 : i64, tpu.core_type = #tpu.core_type<tc>} {
    %c0_i32 = arith.constant 0 : i32
    %0 = tpu.memref_slice %arg14[%c0_i32] : memref<2x!tpu.dma_semaphore, #tpu.memory_space<semaphore_mem>> -> memref<1x!tpu.dma_semaphore, #tpu.memory_space<semaphore_mem>>
    %1 = tpu.memref_squeeze %0 : memref<1x!tpu.dma_semaphore, #tpu.memory_space<semaphore_mem>> -> memref<!tpu.dma_semaphore, #tpu.memory_space<semaphore_mem>>
    tpu.enqueue_dma source(%arg4 : memref<512x512xbf16, #tpu.memory_space<any>>) target(%arg12 : memref<512x512xbf16, #tpu.memory_space<vmem>>) target_semaphore(%1 : memref<!tpu.dma_semaphore, #tpu.memory_space<semaphore_mem>>)
    %c1_i32 = arith.constant 1 : i32
    %2 = tpu.memref_slice %arg14[%c1_i32] : memref<2x!tpu.dma_semaphore, #tpu.memory_space<semaphore_mem>> -> memref<1x!tpu.dma_semaphore, #tpu.memory_space<semaphore_mem>>
    %3 = tpu.memref_squeeze %2 : memref<1x!tpu.dma_semaphore, #tpu.memory_space<semaphore_mem>> -> memref<!tpu.dma_semaphore, #tpu.memory_space<semaphore_mem>>
    tpu.enqueue_dma source(%arg6 : memref<512x256xbf16, #tpu.memory_space<any>>) target(%arg13 : memref<512x256xbf16, #tpu.memory_space<vmem>>) target_semaphore(%3 : memref<!tpu.dma_semaphore, #tpu.memory_space<semaphore_mem>>)
    %c0 = arith.constant 0 : index
    %c0_0 = arith.constant 0 : index
    %4 = vector.load %arg0[%c0, %c0_0] : memref<64x3xf32, #tpu.memory_space<vmem>>, vector<64x3xf32>
    %c0_1 = arith.constant 0 : index
    %c0_2 = arith.constant 0 : index
    %5 = vector.load %arg2[%c0_1, %c0_2] : memref<3x512xf32, #tpu.memory_space<vmem>>, vector<3x512xf32>
    %6 = vector.extract_strided_slice %4 {offsets = [0, 0], sizes = [64, 1], strides = [1, 1]} : vector<64x3xf32> to vector<64x1xf32>
    %7 = vector.extract_strided_slice %5 {offsets = [0, 0], sizes = [1, 512], strides = [1, 1]} : vector<3x512xf32> to vector<1x512xf32>
    %8 = vector.broadcast %6 : vector<64x1xf32> to vector<64x512xf32>
    %9 = vector.broadcast %7 : vector<1x512xf32> to vector<64x512xf32>
    %10 = arith.mulf %8, %9 : vector<64x512xf32>
    %11 = vector.extract_strided_slice %4 {offsets = [0, 1], sizes = [64, 1], strides = [1, 1]} : vector<64x3xf32> to vector<64x1xf32>
    %12 = vector.extract_strided_slice %5 {offsets = [1, 0], sizes = [1, 512], strides = [1, 1]} : vector<3x512xf32> to vector<1x512xf32>
    %13 = vector.broadcast %11 : vector<64x1xf32> to vector<64x512xf32>
    %14 = vector.broadcast %12 : vector<1x512xf32> to vector<64x512xf32>
    %15 = arith.mulf %13, %14 : vector<64x512xf32>
    %16 = arith.addf %10, %15 : vector<64x512xf32>
    %17 = vector.extract_strided_slice %4 {offsets = [0, 2], sizes = [64, 1], strides = [1, 1]} : vector<64x3xf32> to vector<64x1xf32>
    %18 = vector.extract_strided_slice %5 {offsets = [2, 0], sizes = [1, 512], strides = [1, 1]} : vector<3x512xf32> to vector<1x512xf32>
    %19 = vector.broadcast %17 : vector<64x1xf32> to vector<64x512xf32>
    %20 = vector.broadcast %18 : vector<1x512xf32> to vector<64x512xf32>
    %21 = arith.mulf %19, %20 : vector<64x512xf32>
    %22 = arith.addf %16, %21 : vector<64x512xf32>
    %c0_3 = arith.constant 0 : index
    %c0_4 = arith.constant 0 : index
    %23 = vector.load %arg3[%c0_3, %c0_4] : memref<1x512xf32, #tpu.memory_space<vmem>>, vector<1x512xf32>
    %24 = vector.broadcast %23 : vector<1x512xf32> to vector<64x512xf32>
    %25 = arith.addf %22, %24 : vector<64x512xf32>
    %cst = arith.constant 0.000000e+00 : f32
    %26 = vector.broadcast %cst : f32 to vector<64x512xf32>
    %27 = arith.maximumf %25, %26 : vector<64x512xf32>
    %cst_5 = arith.constant dense<0xFF800000> : vector<512xf32>
    %28 = vector.multi_reduction <maximumf>, %27, %cst_5 [0] : vector<64x512xf32> to vector<512xf32>
    %29 = vector.shape_cast %28 : vector<512xf32> to vector<1x512xf32>
    %c0_i32_6 = arith.constant 0 : i32
    %30 = tpu.memref_slice %arg14[%c0_i32_6] : memref<2x!tpu.dma_semaphore, #tpu.memory_space<semaphore_mem>> -> memref<1x!tpu.dma_semaphore, #tpu.memory_space<semaphore_mem>>
    %31 = tpu.memref_squeeze %30 : memref<1x!tpu.dma_semaphore, #tpu.memory_space<semaphore_mem>> -> memref<!tpu.dma_semaphore, #tpu.memory_space<semaphore_mem>>
    tpu.wait_dma2 semaphore(%31 : memref<!tpu.dma_semaphore, #tpu.memory_space<semaphore_mem>>) src(%arg4 : memref<512x512xbf16, #tpu.memory_space<any>>) dst(%arg12 : memref<512x512xbf16, #tpu.memory_space<vmem>>)
    %c0_7 = arith.constant 0 : index
    %c0_8 = arith.constant 0 : index
    %32 = vector.load %arg12[%c0_7, %c0_8] : memref<512x512xbf16, #tpu.memory_space<vmem>>, vector<512x512xbf16>
    %33 = arith.extf %32 : vector<512x512xbf16> to vector<512x512xf32>
    %cst_9 = arith.constant dense<0.000000e+00> : vector<1x512xf32>
    %34 = tpu.matmul %29, %33, %cst_9 {dimension_numbers = #tpu.dot_dimension_numbers<[1], [0], [0], [1], [0, 0, 1, 1], [], []>} : vector<1x512xf32>, vector<512x512xf32>, vector<1x512xf32> -> vector<1x512xf32>
    %c0_10 = arith.constant 0 : index
    %c0_11 = arith.constant 0 : index
    %35 = vector.load %arg5[%c0_10, %c0_11] : memref<1x512xf32, #tpu.memory_space<vmem>>, vector<1x512xf32>
    %36 = arith.addf %34, %35 : vector<1x512xf32>
    %cst_12 = arith.constant 0.000000e+00 : f32
    %37 = vector.broadcast %cst_12 : f32 to vector<1x512xf32>
    %38 = arith.maximumf %36, %37 : vector<1x512xf32>
    %c1_i32_13 = arith.constant 1 : i32
    %39 = tpu.memref_slice %arg14[%c1_i32_13] : memref<2x!tpu.dma_semaphore, #tpu.memory_space<semaphore_mem>> -> memref<1x!tpu.dma_semaphore, #tpu.memory_space<semaphore_mem>>
    %40 = tpu.memref_squeeze %39 : memref<1x!tpu.dma_semaphore, #tpu.memory_space<semaphore_mem>> -> memref<!tpu.dma_semaphore, #tpu.memory_space<semaphore_mem>>
    tpu.wait_dma2 semaphore(%40 : memref<!tpu.dma_semaphore, #tpu.memory_space<semaphore_mem>>) src(%arg6 : memref<512x256xbf16, #tpu.memory_space<any>>) dst(%arg13 : memref<512x256xbf16, #tpu.memory_space<vmem>>)
    %c0_14 = arith.constant 0 : index
    %c0_15 = arith.constant 0 : index
    %41 = vector.load %arg13[%c0_14, %c0_15] : memref<512x256xbf16, #tpu.memory_space<vmem>>, vector<512x256xbf16>
    %42 = arith.extf %41 : vector<512x256xbf16> to vector<512x256xf32>
    %cst_16 = arith.constant dense<0.000000e+00> : vector<1x256xf32>
    %43 = tpu.matmul %38, %42, %cst_16 {dimension_numbers = #tpu.dot_dimension_numbers<[1], [0], [0], [1], [0, 0, 1, 1], [], []>} : vector<1x512xf32>, vector<512x256xf32>, vector<1x256xf32> -> vector<1x256xf32>
    %c0_17 = arith.constant 0 : index
    %c0_18 = arith.constant 0 : index
    %44 = vector.load %arg7[%c0_17, %c0_18] : memref<1x256xf32, #tpu.memory_space<vmem>>, vector<1x256xf32>
    %45 = arith.addf %43, %44 : vector<1x256xf32>
    %46 = arith.negf %45 : vector<1x256xf32>
    %47 = math.exp %46 : vector<1x256xf32>
    %cst_19 = arith.constant 1.000000e+00 : f32
    %48 = vector.broadcast %cst_19 : f32 to vector<1x256xf32>
    %49 = arith.addf %48, %47 : vector<1x256xf32>
    %50 = arith.divf %48, %49 : vector<1x256xf32>
    %c0_20 = arith.constant 0 : index
    %c0_21 = arith.constant 0 : index
    %51 = vector.load %arg8[%c0_20, %c0_21] : memref<1x256xf32, #tpu.memory_space<vmem>>, vector<1x256xf32>
    %52 = arith.mulf %50, %51 : vector<1x256xf32>
    %c0_22 = arith.constant 0 : index
    %c0_23 = arith.constant 0 : index
    %53 = vector.load %arg9[%c0_22, %c0_23] : memref<1x256xf32, #tpu.memory_space<vmem>>, vector<1x256xf32>
    %54 = arith.addf %52, %53 : vector<1x256xf32>
    %55 = vector.extract_strided_slice %54 {offsets = [0, 0], sizes = [1, 32], strides = [1, 1]} : vector<1x256xf32> to vector<1x32xf32>
    %56 = vector.extract_strided_slice %54 {offsets = [0, 32], sizes = [1, 32], strides = [1, 1]} : vector<1x256xf32> to vector<1x32xf32>
    %57 = vector.extract_strided_slice %54 {offsets = [0, 64], sizes = [1, 32], strides = [1, 1]} : vector<1x256xf32> to vector<1x32xf32>
    %58 = vector.extract_strided_slice %54 {offsets = [0, 96], sizes = [1, 32], strides = [1, 1]} : vector<1x256xf32> to vector<1x32xf32>
    %59 = vector.extract_strided_slice %54 {offsets = [0, 128], sizes = [1, 32], strides = [1, 1]} : vector<1x256xf32> to vector<1x32xf32>
    %60 = vector.extract_strided_slice %54 {offsets = [0, 160], sizes = [1, 32], strides = [1, 1]} : vector<1x256xf32> to vector<1x32xf32>
    %61 = vector.extract_strided_slice %54 {offsets = [0, 192], sizes = [1, 32], strides = [1, 1]} : vector<1x256xf32> to vector<1x32xf32>
    %62 = vector.extract_strided_slice %54 {offsets = [0, 224], sizes = [1, 32], strides = [1, 1]} : vector<1x256xf32> to vector<1x32xf32>
    %c0_24 = arith.constant 0 : index
    %c0_25 = arith.constant 0 : index
    %63 = vector.load %arg11[%c0_24, %c0_25] : memref<8x32xf32, #tpu.memory_space<vmem>>, vector<1x32xf32>
    tpu.vector_store %arg11[%c0_24, %c0_25], %55 {strides = array<i32>} : memref<8x32xf32, #tpu.memory_space<vmem>>, vector<1x32xf32>,
    %c1 = arith.constant 1 : index
    %c0_26 = arith.constant 0 : index
    %64 = vector.load %arg11[%c1, %c0_26] : memref<8x32xf32, #tpu.memory_space<vmem>>, vector<1x32xf32>
    tpu.vector_store %arg11[%c1, %c0_26], %56 {strides = array<i32>} : memref<8x32xf32, #tpu.memory_space<vmem>>, vector<1x32xf32>,
    %c2 = arith.constant 2 : index
    %c0_27 = arith.constant 0 : index
    %65 = vector.load %arg11[%c2, %c0_27] : memref<8x32xf32, #tpu.memory_space<vmem>>, vector<1x32xf32>
    tpu.vector_store %arg11[%c2, %c0_27], %57 {strides = array<i32>} : memref<8x32xf32, #tpu.memory_space<vmem>>, vector<1x32xf32>,
    %c3 = arith.constant 3 : index
    %c0_28 = arith.constant 0 : index
    %66 = vector.load %arg11[%c3, %c0_28] : memref<8x32xf32, #tpu.memory_space<vmem>>, vector<1x32xf32>
    tpu.vector_store %arg11[%c3, %c0_28], %58 {strides = array<i32>} : memref<8x32xf32, #tpu.memory_space<vmem>>, vector<1x32xf32>,
    %c4 = arith.constant 4 : index
    %c0_29 = arith.constant 0 : index
    %67 = vector.load %arg11[%c4, %c0_29] : memref<8x32xf32, #tpu.memory_space<vmem>>, vector<1x32xf32>
    tpu.vector_store %arg11[%c4, %c0_29], %59 {strides = array<i32>} : memref<8x32xf32, #tpu.memory_space<vmem>>, vector<1x32xf32>,
    %c5 = arith.constant 5 : index
    %c0_30 = arith.constant 0 : index
    %68 = vector.load %arg11[%c5, %c0_30] : memref<8x32xf32, #tpu.memory_space<vmem>>, vector<1x32xf32>
    tpu.vector_store %arg11[%c5, %c0_30], %60 {strides = array<i32>} : memref<8x32xf32, #tpu.memory_space<vmem>>, vector<1x32xf32>,
    %c6 = arith.constant 6 : index
    %c0_31 = arith.constant 0 : index
    %69 = vector.load %arg11[%c6, %c0_31] : memref<8x32xf32, #tpu.memory_space<vmem>>, vector<1x32xf32>
    tpu.vector_store %arg11[%c6, %c0_31], %61 {strides = array<i32>} : memref<8x32xf32, #tpu.memory_space<vmem>>, vector<1x32xf32>,
    %c7 = arith.constant 7 : index
    %c0_32 = arith.constant 0 : index
    %70 = vector.load %arg11[%c7, %c0_32] : memref<8x32xf32, #tpu.memory_space<vmem>>, vector<1x32xf32>
    tpu.vector_store %arg11[%c7, %c0_32], %62 {strides = array<i32>} : memref<8x32xf32, #tpu.memory_space<vmem>>, vector<1x32xf32>,
    %71 = arith.mulf %60, %60 : vector<1x32xf32>
    %72 = arith.mulf %61, %61 : vector<1x32xf32>
    %73 = arith.addf %71, %72 : vector<1x32xf32>
    %74 = arith.mulf %62, %62 : vector<1x32xf32>
    %75 = arith.addf %73, %74 : vector<1x32xf32>
    %cst_33 = arith.constant 9.99999993E-9 : f32
    %76 = vector.broadcast %cst_33 : f32 to vector<1x32xf32>
    %77 = arith.addf %75, %76 : vector<1x32xf32>
    %78 = math.rsqrt %77 : vector<1x32xf32>
    %79 = arith.mulf %60, %78 : vector<1x32xf32>
    %80 = arith.mulf %61, %78 : vector<1x32xf32>
    %81 = arith.mulf %62, %78 : vector<1x32xf32>
    %cst_34 = arith.constant 9.99999993E-9 : f32
    %82 = vector.broadcast %cst_34 : f32 to vector<1x32xf32>
    %83 = arith.addf %59, %82 : vector<1x32xf32>
    %84 = tpu.reciprocal %83 {approx = true} : vector<1x32xf32> -> vector<1x32xf32>
    %85 = arith.mulf %58, %84 : vector<1x32xf32>
    %c0_35 = arith.constant 0 : index
    %c0_36 = arith.constant 0 : index
    %86 = vector.load %arg1[%c0_35, %c0_36] : memref<128x3xf32, #tpu.memory_space<vmem>>, vector<128x3xf32>
    %87 = vector.extract_strided_slice %86 {offsets = [0, 0], sizes = [128, 1], strides = [1, 1]} : vector<128x3xf32> to vector<128x1xf32>
    %88 = vector.broadcast %87 : vector<128x1xf32> to vector<128x32xf32>
    %89 = vector.broadcast %55 : vector<1x32xf32> to vector<128x32xf32>
    %90 = arith.subf %88, %89 : vector<128x32xf32>
    %91 = vector.extract_strided_slice %86 {offsets = [0, 1], sizes = [128, 1], strides = [1, 1]} : vector<128x3xf32> to vector<128x1xf32>
    %92 = vector.broadcast %91 : vector<128x1xf32> to vector<128x32xf32>
    %93 = vector.broadcast %56 : vector<1x32xf32> to vector<128x32xf32>
    %94 = arith.subf %92, %93 : vector<128x32xf32>
    %95 = vector.extract_strided_slice %86 {offsets = [0, 2], sizes = [128, 1], strides = [1, 1]} : vector<128x3xf32> to vector<128x1xf32>
    %96 = vector.broadcast %95 : vector<128x1xf32> to vector<128x32xf32>
    %97 = vector.broadcast %57 : vector<1x32xf32> to vector<128x32xf32>
    %98 = arith.subf %96, %97 : vector<128x32xf32>
    %99 = vector.broadcast %79 : vector<1x32xf32> to vector<128x32xf32>
    %100 = arith.mulf %90, %99 : vector<128x32xf32>
    %101 = vector.broadcast %80 : vector<1x32xf32> to vector<128x32xf32>
    %102 = arith.mulf %94, %101 : vector<128x32xf32>
    %103 = arith.addf %100, %102 : vector<128x32xf32>
    %104 = vector.broadcast %81 : vector<1x32xf32> to vector<128x32xf32>
    %105 = arith.mulf %98, %104 : vector<128x32xf32>
    %106 = arith.addf %103, %105 : vector<128x32xf32>
    %107 = arith.mulf %90, %90 : vector<128x32xf32>
    %108 = arith.mulf %94, %94 : vector<128x32xf32>
    %109 = arith.addf %107, %108 : vector<128x32xf32>
    %110 = arith.mulf %98, %98 : vector<128x32xf32>
    %111 = arith.addf %109, %110 : vector<128x32xf32>
    %112 = arith.mulf %106, %106 : vector<128x32xf32>
    %113 = arith.subf %111, %112 : vector<128x32xf32>
    %cst_37 = arith.constant 0.000000e+00 : f32
    %114 = vector.broadcast %cst_37 : f32 to vector<128x32xf32>
    %115 = arith.maximumf %113, %114 : vector<128x32xf32>
    %116 = math.sqrt %115 : vector<128x32xf32>
    %117 = vector.broadcast %85 : vector<1x32xf32> to vector<128x32xf32>
    %118 = arith.mulf %117, %106 : vector<128x32xf32>
    %119 = vector.broadcast %58 : vector<1x32xf32> to vector<128x32xf32>
    %120 = arith.subf %119, %118 : vector<128x32xf32>
    %121 = arith.subf %116, %120 : vector<128x32xf32>
    %122 = math.absf %106 : vector<128x32xf32>
    %123 = vector.broadcast %59 : vector<1x32xf32> to vector<128x32xf32>
    %124 = arith.subf %122, %123 : vector<128x32xf32>
    %125 = arith.maximumf %121, %124 : vector<128x32xf32>
    %c0_38 = arith.constant 0 : index
    %c0_39 = arith.constant 0 : index
    %126 = vector.load %arg10[%c0_38, %c0_39] : memref<128x32xf32, #tpu.memory_space<vmem>>, vector<128x32xf32>
    tpu.vector_store %arg10[%c0_38, %c0_39], %125 {strides = array<i32>} : memref<128x32xf32, #tpu.memory_space<vmem>>, vector<128x32xf32>,
    return
  }
}

</mosaic_0001>

<llo_original>
// kernel: cone_net_forward.1
$region0: #{cone_net_forward.1}
  #allocation0 [shape = 'u32[]', space=smem, size = 0x4, offset = 0x4, fixed_abs, tag = 'smem constant byte address 0x4 - core index']
  #allocation1 [shape = 'u32[144,128]{1,0:T(1,128)}', space=vmem, size = 0x12000, scoped, tag = 'internal scratch']
  #allocation2 [shape = 'bf16[512,512]{1,0:T(16,128)(2,1)}', space=vmem, size = 0x80000, scoped, tag = 'scratch operand']
  #allocation3 [shape = 'bf16[512,256]{1,0:T(16,128)(2,1)}', space=vmem, size = 0x40000, scoped, tag = 'scratch operand']
  #allocation4 [shape = 's32[2]{0}', space=sflag, size = 0x8, scoped, tag = 'scratch operand']
  #allocation7 [shape = 's32[]', space=sflag, size = 0x4, offset = 0, fixed_abs, tag = 'sflag constant byte address 0x0 - dummy sync flag']
  #allocation9 [shape = 's32[]', space=sflag, size = 0x4, offset = 0, fixed_abs, tag = 'sflag constant byte address 0x0 - dummy sync flag']
  %s0 = inlined_call_operand.vmem [shape: f32[64,3], index: 0, kind: input, shape index: {}]
  %s1 = inlined_call_operand.vmem [shape: f32[128,3], index: 1, kind: input, shape index: {}]
  %s2 = inlined_call_operand.vmem [shape: f32[3,512], index: 2, kind: input, shape index: {}]
  %s3 = inlined_call_operand.vmem [shape: f32[1,512], index: 3, kind: input, shape index: {}]
  %s4 = inlined_call_operand.hbm [shape: bf16[512,512], index: 4, kind: input, shape index: {}]
  %s5 = inlined_call_operand.vmem [shape: f32[1,512], index: 5, kind: input, shape index: {}]
  %s6 = inlined_call_operand.hbm [shape: bf16[512,256], index: 6, kind: input, shape index: {}]
  %s7 = inlined_call_operand.vmem [shape: f32[1,256], index: 7, kind: input, shape index: {}]
  %s8 = inlined_call_operand.vmem [shape: f32[1,256], index: 8, kind: input, shape index: {}]
  %s9 = inlined_call_operand.vmem [shape: f32[1,256], index: 9, kind: input, shape index: {}]
  %s10 = inlined_call_operand.vmem [shape: f32[128,32], index: 10, kind: output, shape index: {0}]
  %s11 = inlined_call_operand.hbm [shape: f32[8,32], index: 11, kind: output, shape index: {1}]
  %12 = xla_tuple %s10, %s11
  %s13 = sld [smem:[#allocation0]]
  $region50: #{cone_net_forward.1} parent=0
    _
  %s15 = ssub.s32 1, %s13
  %s16 = scalar_select 0, %s15, %s13
  $region1: #{cone_net_forward.1} parent=0
    #allocation5 [shape = 'u8[4096]{0}', space=vmem, size = 0x1000, scoped, tag = 'output window, operand 1, single buffered']
    #allocation6 [shape = 's32[1]{0}', space=sflag, size = 0x4, scoped, tag = 'scoped memory for cone_net_forward.1']
    #allocation8 [shape = 'u32[9]{0}', space=smem, size = 0x24, scoped, tag = 'DMA stride descriptor']
    #allocation10 [shape = 'u32[9]{0}', space=smem, size = 0x24, scoped, tag = 'DMA stride descriptor']
    %17 = vsyncpa [#allocation6], 0
    // Predicated region
    $region2: #{cone_net_forward.1} parent=1 // pred_check
      _
    $region3: #{cone_net_forward.1} parent=1 // pred_check_branch
      %19 = sbr.rel (0) target = $region5
    $region4: #{cone_net_forward.1} parent=1 // pred_region
      _
    $region5: #{cone_net_forward.1} parent=1 // pred_fallthru
      _
    // Predicated region
    $region6: #{cone_net_forward.1} parent=1 // pred_check
      _
    $region7: #{cone_net_forward.1} parent=1 // pred_check_branch
      %21 = sbr.rel (0) target = $region9
    $region8: #{cone_net_forward.1} parent=1 // pred_region
      _
    $region9: #{cone_net_forward.1} parent=1 // pred_fallthru
      _
    // Predicated region
    $region10: #{cone_net_forward.1} parent=1 // pred_check
      _
    $region11: #{cone_net_forward.1} parent=1 // pred_check_branch
      %23 = sbr.rel (0) target = $region13
    $region12: #{cone_net_forward.1} parent=1 // pred_region
      _
    $region13: #{cone_net_forward.1} parent=1 // pred_fallthru
      _
    // Predicated region
    $region14: #{cone_net_forward.1} parent=1 // pred_check
      _
    $region15: #{cone_net_forward.1} parent=1 // pred_check_branch
      %25 = sbr.rel (0) target = $region17
    $region16: #{cone_net_forward.1} parent=1 // pred_region
      _
    $region17: #{cone_net_forward.1} parent=1 // pred_fallthru
      _
    // Predicated region
    $region18: #{cone_net_forward.1} parent=1 // pred_check
      _
    $region19: #{cone_net_forward.1} parent=1 // pred_check_branch
      %27 = sbr.rel (0) target = $region21
    $region20: #{cone_net_forward.1} parent=1 // pred_region
      _
    $region21: #{cone_net_forward.1} parent=1 // pred_fallthru
      _
    // Predicated region
    $region22: #{cone_net_forward.1} parent=1 // pred_check
      _
    $region23: #{cone_net_forward.1} parent=1 // pred_check_branch
      %29 = sbr.rel (0) target = $region25
    $region24: #{cone_net_forward.1} parent=1 // pred_region
      _
    $region25: #{cone_net_forward.1} parent=1 // pred_fallthru
      _
    // Predicated region
    $region26: #{cone_net_forward.1} parent=1 // pred_check
      _
    $region27: #{cone_net_forward.1} parent=1 // pred_check_branch
      %31 = sbr.rel (0) target = $region29
    $region28: #{cone_net_forward.1} parent=1 // pred_region
      _
    $region29: #{cone_net_forward.1} parent=1 // pred_fallthru
      _
    // Predicated region
    $region30: #{cone_net_forward.1} parent=1 // pred_check
      _
    $region31: #{cone_net_forward.1} parent=1 // pred_check_branch
      %33 = sbr.rel (0) target = $region33
    $region32: #{cone_net_forward.1} parent=1 // pred_region
      _
    $region33: #{cone_net_forward.1} parent=1 // pred_fallthru
      _
    %s35 = sshll.u32 1, 14
    %s36 = sxor.u32 4294967295, %s35
    %s38 = sld [smem:[#allocation0]]
    %s39 = sadd.s32 2, %s38
    %s41 = sshll.u32 7, 26
    %s42 = sxor.u32 4294967295, %s41
    %s43 = sand.u32 0, %s42
    %s44 = sshll.u32 %s39, 26
    %s45 = sor.u32 %s43, %s44
    %s46 = sshll.u32 [#allocation2], 4
    %s47 = int_to_ptr.vmem [resolvable:$true] %s46
    %50 = sst [smem:[#allocation8]] 512
    %s51 = scalar_lea.smem [#allocation8], 1
    %52 = sst [smem:[%s51]] 512
    %s53 = scalar_lea.smem [#allocation8], 2
    %54 = sst [smem:[%s53]] 4
    %s55 = scalar_lea.smem [#allocation8], 3
    %56 = sst [smem:[%s55]] 64
    %s57 = scalar_lea.smem [#allocation8], 4
    %58 = sst [smem:[%s57]] 128
    %s59 = scalar_lea.smem [#allocation8], 5
    %60 = sst [smem:[%s59]] 2
    %s61 = scalar_lea.smem [#allocation8], 6
    %62 = sst [smem:[%s61]] 256
    %s63 = scalar_lea.smem [#allocation8], 7
    %64 = sst [smem:[%s63]] 64
    %s65 = scalar_lea.smem [#allocation8], 8
    %66 = sst [smem:[%s65]] 4
    %68 = dma.general %s4, 16384, %s47, [#allocation4], [#allocation7], [#allocation8], %s45, 0
    %s69 = scalar_lea.sflag [#allocation4], 1
    %s71 = sshll.u32 1, 14
    %s72 = sxor.u32 4294967295, %s71
    %s74 = sadd.s32 2, %s38
    %s76 = sshll.u32 7, 26
    %s77 = sxor.u32 4294967295, %s76
    %s78 = sand.u32 0, %s77
    %s79 = sshll.u32 %s74, 26
    %s80 = sor.u32 %s78, %s79
    %s81 = sshll.u32 [#allocation3], 4
    %s82 = int_to_ptr.vmem [resolvable:$true] %s81
    %85 = sst [smem:[#allocation10]] 256
    %s86 = scalar_lea.smem [#allocation10], 1
    %87 = sst [smem:[%s86]] 256
    %s88 = scalar_lea.smem [#allocation10], 2
    %89 = sst [smem:[%s88]] 2
    %s90 = scalar_lea.smem [#allocation10], 3
    %91 = sst [smem:[%s90]] 64
    %s92 = scalar_lea.smem [#allocation10], 4
    %93 = sst [smem:[%s92]] 128
    %s94 = scalar_lea.smem [#allocation10], 5
    %95 = sst [smem:[%s94]] 2
    %s96 = scalar_lea.smem [#allocation10], 6
    %97 = sst [smem:[%s96]] 128
    %s98 = scalar_lea.smem [#allocation10], 7
    %99 = sst [smem:[%s98]] 64
    %s100 = scalar_lea.smem [#allocation10], 8
    %101 = sst [smem:[%s100]] 4
    %103 = dma.general %s6, 8192, %s82, %s69, [#allocation9], [#allocation10], %s80, 0
    %v104 = vld [vmem:[%s0] sm:$0xff]
    %v105 = vld [vmem:[%s0 + $0x8] sm:$0xff]
    %v106 = vld [vmem:[%s0 + $0x10] sm:$0xff]
    %v107 = vld [vmem:[%s0 + $0x18] sm:$0xff]
    %v108 = vld [vmem:[%s0 + $0x20] sm:$0xff]
    %v109 = vld [vmem:[%s0 + $0x28] sm:$0xff]
    %v110 = vld [vmem:[%s0 + $0x30] sm:$0xff]
    %v111 = vld [vmem:[%s0 + $0x38] sm:$0xff]
    %v112 = vld [vmem:[%s2] sm:$0x77]
    %v113 = vld [vmem:[%s2 + $0x8] sm:$0x77]
    %115 = vset.pattern.permute.xlu0 0
    %116 = vperm.xlu0 %115, %v104
    %v117 = vpop.permute.xlu0 %116
    %120 = vset.pattern.permute.xlu0 0
    %121 = vperm.xlu0 %120, %v105
    %v122 = vpop.permute.xlu0 %121
    %125 = vset.pattern.permute.xlu0 0
    %126 = vperm.xlu0 %125, %v106
    %v127 = vpop.permute.xlu0 %126
    %130 = vset.pattern.permute.xlu0 0
    %131 = vperm.xlu0 %130, %v107
    %v132 = vpop.permute.xlu0 %131
    %135 = vset.pattern.permute.xlu0 0
    %136 = vperm.xlu0 %135, %v108
    %v137 = vpop.permute.xlu0 %136
    %140 = vset.pattern.permute.xlu0 0
    %141 = vperm.xlu0 %140, %v109
    %v142 = vpop.permute.xlu0 %141
    %145 = vset.pattern.permute.xlu0 0
    %146 = vperm.xlu0 %145, %v110
    %v147 = vpop.permute.xlu0 %146
    %150 = vset.pattern.permute.xlu0 0
    %151 = vperm.xlu0 %150, %v111
    %v152 = vpop.permute.xlu0 %151
    %v156 = vlaneseq
    %v157 = vshrl.u32 %v156, 7
    %v158 = vsub.s32 0, %v157
    %v159 = vrot.slane %v112, %v158
    %v160 = vlaneseq
    %v161 = vshrl.u32 %v160, 7
    %v162 = vsub.s32 4, %v161
    %v163 = vrot.slane %v112, %v162
    %v164 = vlaneseq
    %v165 = vshrl.u32 %v164, 7
    %v166 = vsub.s32 0, %v165
    %v167 = vrot.slane %v113, %v166
    %v168 = vlaneseq
    %v169 = vshrl.u32 %v168, 7
    %v170 = vsub.s32 4, %v169
    %v171 = vrot.slane %v113, %v170
    %v176 = vlaneseq
    %v177 = vshrl.u32 %v176, 7
    %v178 = vsub.s32 0, %v177
    %v179 = vrot.slane %v159, %v178
    %v180 = vlaneseq
    %v181 = vshrl.u32 %v180, 7
    %v182 = vsub.s32 0, %v181
    %v183 = vrot.slane %v163, %v182
    %v184 = vlaneseq
    %v185 = vshrl.u32 %v184, 7
    %v186 = vsub.s32 0, %v185
    %v187 = vrot.slane %v167, %v186
    %v188 = vlaneseq
    %v189 = vshrl.u32 %v188, 7
    %v190 = vsub.s32 0, %v189
    %v191 = vrot.slane %v171, %v190
    %v192 = vmul.f32 %v117, %v179
    %v193 = vmul.f32 %v117, %v183
    %v194 = vmul.f32 %v117, %v187
    %v195 = vmul.f32 %v117, %v191
    %v196 = vmul.f32 %v122, %v179
    %v197 = vmul.f32 %v122, %v183
    %v198 = vmul.f32 %v122, %v187
    %v199 = vmul.f32 %v122, %v191
    %v200 = vmul.f32 %v127, %v179
    %v201 = vmul.f32 %v127, %v183
    %v202 = vmul.f32 %v127, %v187
    %v203 = vmul.f32 %v127, %v191
    %v204 = vmul.f32 %v132, %v179
    %v205 = vmul.f32 %v132, %v183
    %v206 = vmul.f32 %v132, %v187
    %v207 = vmul.f32 %v132, %v191
    %v208 = vmul.f32 %v137, %v179
    %v209 = vmul.f32 %v137, %v183
    %v210 = vmul.f32 %v137, %v187
    %v211 = vmul.f32 %v137, %v191
    %v212 = vmul.f32 %v142, %v179
    %v213 = vmul.f32 %v142, %v183
    %v214 = vmul.f32 %v142, %v187
    %v215 = vmul.f32 %v142, %v191
    %v216 = vmul.f32 %v147, %v179
    %v217 = vmul.f32 %v147, %v183
    %v218 = vmul.f32 %v147, %v187
    %v219 = vmul.f32 %v147, %v191
    %v220 = vmul.f32 %v152, %v179
    %v221 = vmul.f32 %v152, %v183
    %v222 = vmul.f32 %v152, %v187
    %v223 = vmul.f32 %v152, %v191
    %224 = vset.pattern.permute.xlu0 1
    %225 = vperm.xlu0 %224, %v104
    %v226 = vpop.permute.xlu0 %225
    %228 = vset.pattern.permute.xlu0 1
    %229 = vperm.xlu0 %228, %v105
    %v230 = vpop.permute.xlu0 %229
    %232 = vset.pattern.permute.xlu0 1
    %233 = vperm.xlu0 %232, %v106
    %v234 = vpop.permute.xlu0 %233
    %236 = vset.pattern.permute.xlu0 1
    %237 = vperm.xlu0 %236, %v107
    %v238 = vpop.permute.xlu0 %237
    %240 = vset.pattern.permute.xlu0 1
    %241 = vperm.xlu0 %240, %v108
    %v242 = vpop.permute.xlu0 %241
    %244 = vset.pattern.permute.xlu0 1
    %245 = vperm.xlu0 %244, %v109
    %v246 = vpop.permute.xlu0 %245
    %248 = vset.pattern.permute.xlu0 1
    %249 = vperm.xlu0 %248, %v110
    %v250 = vpop.permute.xlu0 %249
    %252 = vset.pattern.permute.xlu0 1
    %253 = vperm.xlu0 %252, %v111
    %v254 = vpop.permute.xlu0 %253
    %v256 = vlaneseq
    %v257 = vshrl.u32 %v256, 7
    %v258 = vsub.s32 1, %v257
    %v259 = vrot.slane %v112, %v258
    %v260 = vlaneseq
    %v261 = vshrl.u32 %v260, 7
    %v262 = vsub.s32 5, %v261
    %v263 = vrot.slane %v112, %v262
    %v264 = vlaneseq
    %v265 = vshrl.u32 %v264, 7
    %v266 = vsub.s32 1, %v265
    %v267 = vrot.slane %v113, %v266
    %v268 = vlaneseq
    %v269 = vshrl.u32 %v268, 7
    %v270 = vsub.s32 5, %v269
    %v271 = vrot.slane %v113, %v270
    %v276 = vlaneseq
    %v277 = vshrl.u32 %v276, 7
    %v278 = vsub.s32 1, %v277
    %v279 = vrot.slane %v259, %v278
    %v280 = vlaneseq
    %v281 = vshrl.u32 %v280, 7
    %v282 = vsub.s32 1, %v281
    %v283 = vrot.slane %v263, %v282
    %v284 = vlaneseq
    %v285 = vshrl.u32 %v284, 7
    %v286 = vsub.s32 1, %v285
    %v287 = vrot.slane %v267, %v286
    %v288 = vlaneseq
    %v289 = vshrl.u32 %v288, 7
    %v290 = vsub.s32 1, %v289
    %v291 = vrot.slane %v271, %v290
    %v292 = vmul.f32 %v226, %v279
    %v293 = vmul.f32 %v226, %v283
    %v294 = vmul.f32 %v226, %v287
    %v295 = vmul.f32 %v226, %v291
    %v296 = vmul.f32 %v230, %v279
    %v297 = vmul.f32 %v230, %v283
    %v298 = vmul.f32 %v230, %v287
    %v299 = vmul.f32 %v230, %v291
    %v300 = vmul.f32 %v234, %v279
    %v301 = vmul.f32 %v234, %v283
    %v302 = vmul.f32 %v234, %v287
    %v303 = vmul.f32 %v234, %v291
    %v304 = vmul.f32 %v238, %v279
    %v305 = vmul.f32 %v238, %v283
    %v306 = vmul.f32 %v238, %v287
    %v307 = vmul.f32 %v238, %v291
    %v308 = vmul.f32 %v242, %v279
    %v309 = vmul.f32 %v242, %v283
    %v310 = vmul.f32 %v242, %v287
    %v311 = vmul.f32 %v242, %v291
    %v312 = vmul.f32 %v246, %v279
    %v313 = vmul.f32 %v246, %v283
    %v314 = vmul.f32 %v246, %v287
    %v315 = vmul.f32 %v246, %v291
    %v316 = vmul.f32 %v250, %v279
    %v317 = vmul.f32 %v250, %v283
    %v318 = vmul.f32 %v250, %v287
    %v319 = vmul.f32 %v250, %v291
    %v320 = vmul.f32 %v254, %v279
    %v321 = vmul.f32 %v254, %v283
    %v322 = vmul.f32 %v254, %v287
    %v323 = vmul.f32 %v254, %v291
    %v324 = vadd.f32 %v192, %v292
    %v325 = vadd.f32 %v193, %v293
    %v326 = vadd.f32 %v194, %v294
    %v327 = vadd.f32 %v195, %v295
    %v328 = vadd.f32 %v196, %v296
    %v329 = vadd.f32 %v197, %v297
    %v330 = vadd.f32 %v198, %v298
    %v331 = vadd.f32 %v199, %v299
    %v332 = vadd.f32 %v200, %v300
    %v333 = vadd.f32 %v201, %v301
    %v334 = vadd.f32 %v202, %v302
    %v335 = vadd.f32 %v203, %v303
    %v336 = vadd.f32 %v204, %v304
    %v337 = vadd.f32 %v205, %v305
    %v338 = vadd.f32 %v206, %v306
    %v339 = vadd.f32 %v207, %v307
    %v340 = vadd.f32 %v208, %v308
    %v341 = vadd.f32 %v209, %v309
    %v342 = vadd.f32 %v210, %v310
    %v343 = vadd.f32 %v211, %v311
    %v344 = vadd.f32 %v212, %v312
    %v345 = vadd.f32 %v213, %v313
    %v346 = vadd.f32 %v214, %v314
    %v347 = vadd.f32 %v215, %v315
    %v348 = vadd.f32 %v216, %v316
    %v349 = vadd.f32 %v217, %v317
    %v350 = vadd.f32 %v218, %v318
    %v351 = vadd.f32 %v219, %v319
    %v352 = vadd.f32 %v220, %v320
    %v353 = vadd.f32 %v221, %v321
    %v354 = vadd.f32 %v222, %v322
    %v355 = vadd.f32 %v223, %v323
    %356 = vset.pattern.permute.xlu0 2
    %357 = vperm.xlu0 %356, %v104
    %v358 = vpop.permute.xlu0 %357
    %360 = vset.pattern.permute.xlu0 2
    %361 = vperm.xlu0 %360, %v105
    %v362 = vpop.permute.xlu0 %361
    %364 = vset.pattern.permute.xlu0 2
    %365 = vperm.xlu0 %364, %v106
    %v366 = vpop.permute.xlu0 %365
    %368 = vset.pattern.permute.xlu0 2
    %369 = vperm.xlu0 %368, %v107
    %v370 = vpop.permute.xlu0 %369
    %372 = vset.pattern.permute.xlu0 2
    %373 = vperm.xlu0 %372, %v108
    %v374 = vpop.permute.xlu0 %373
    %376 = vset.pattern.permute.xlu0 2
    %377 = vperm.xlu0 %376, %v109
    %v378 = vpop.permute.xlu0 %377
    %380 = vset.pattern.permute.xlu0 2
    %381 = vperm.xlu0 %380, %v110
    %v382 = vpop.permute.xlu0 %381
    %384 = vset.pattern.permute.xlu0 2
    %385 = vperm.xlu0 %384, %v111
    %v386 = vpop.permute.xlu0 %385
    %v388 = vlaneseq
    %v389 = vshrl.u32 %v388, 7
    %v390 = vsub.s32 2, %v389
    %v391 = vrot.slane %v112, %v390
    %v392 = vlaneseq
    %v393 = vshrl.u32 %v392, 7
    %v394 = vsub.s32 6, %v393
    %v395 = vrot.slane %v112, %v394
    %v396 = vlaneseq
    %v397 = vshrl.u32 %v396, 7
    %v398 = vsub.s32 2, %v397
    %v399 = vrot.slane %v113, %v398
    %v400 = vlaneseq
    %v401 = vshrl.u32 %v400, 7
    %v402 = vsub.s32 6, %v401
    %v403 = vrot.slane %v113, %v402
    %v408 = vlaneseq
    %v409 = vshrl.u32 %v408, 7
    %v410 = vsub.s32 2, %v409
    %v411 = vrot.slane %v391, %v410
    %v412 = vlaneseq
    %v413 = vshrl.u32 %v412, 7
    %v414 = vsub.s32 2, %v413
    %v415 = vrot.slane %v395, %v414
    %v416 = vlaneseq
    %v417 = vshrl.u32 %v416, 7
    %v418 = vsub.s32 2, %v417
    %v419 = vrot.slane %v399, %v418
    %v420 = vlaneseq
    %v421 = vshrl.u32 %v420, 7
    %v422 = vsub.s32 2, %v421
    %v423 = vrot.slane %v403, %v422
    %v424 = vmul.f32 %v358, %v411
    %v425 = vmul.f32 %v358, %v415
    %v426 = vmul.f32 %v358, %v419
    %v427 = vmul.f32 %v358, %v423
    %v428 = vmul.f32 %v362, %v411
    %v429 = vmul.f32 %v362, %v415
    %v430 = vmul.f32 %v362, %v419
    %v431 = vmul.f32 %v362, %v423
    %v432 = vmul.f32 %v366, %v411
    %v433 = vmul.f32 %v366, %v415
    %v434 = vmul.f32 %v366, %v419
    %v435 = vmul.f32 %v366, %v423
    %v436 = vmul.f32 %v370, %v411
    %v437 = vmul.f32 %v370, %v415
    %v438 = vmul.f32 %v370, %v419
    %v439 = vmul.f32 %v370, %v423
    %v440 = vmul.f32 %v374, %v411
    %v441 = vmul.f32 %v374, %v415
    %v442 = vmul.f32 %v374, %v419
    %v443 = vmul.f32 %v374, %v423
    %v444 = vmul.f32 %v378, %v411
    %v445 = vmul.f32 %v378, %v415
    %v446 = vmul.f32 %v378, %v419
    %v447 = vmul.f32 %v378, %v423
    %v448 = vmul.f32 %v382, %v411
    %v449 = vmul.f32 %v382, %v415
    %v450 = vmul.f32 %v382, %v419
    %v451 = vmul.f32 %v382, %v423
    %v452 = vmul.f32 %v386, %v411
    %v453 = vmul.f32 %v386, %v415
    %v454 = vmul.f32 %v386, %v419
    %v455 = vmul.f32 %v386, %v423
    %v456 = vadd.f32 %v324, %v424
    %v457 = vadd.f32 %v325, %v425
    %v458 = vadd.f32 %v326, %v426
    %v459 = vadd.f32 %v327, %v427
    %v460 = vadd.f32 %v328, %v428
    %v461 = vadd.f32 %v329, %v429
    %v462 = vadd.f32 %v330, %v430
    %v463 = vadd.f32 %v331, %v431
    %v464 = vadd.f32 %v332, %v432
    %v465 = vadd.f32 %v333, %v433
    %v466 = vadd.f32 %v334, %v434
    %v467 = vadd.f32 %v335, %v435
    %v468 = vadd.f32 %v336, %v436
    %v469 = vadd.f32 %v337, %v437
    %v470 = vadd.f32 %v338, %v438
    %v471 = vadd.f32 %v339, %v439
    %v472 = vadd.f32 %v340, %v440
    %v473 = vadd.f32 %v341, %v441
    %v474 = vadd.f32 %v342, %v442
    %v475 = vadd.f32 %v343, %v443
    %v476 = vadd.f32 %v344, %v444
    %v477 = vadd.f32 %v345, %v445
    %v478 = vadd.f32 %v346, %v446
    %v479 = vadd.f32 %v347, %v447
    %v480 = vadd.f32 %v348, %v448
    %v481 = vadd.f32 %v349, %v449
    %v482 = vadd.f32 %v350, %v450
    %v483 = vadd.f32 %v351, %v451
    %v484 = vadd.f32 %v352, %v452
    %v485 = vadd.f32 %v353, %v453
    %v486 = vadd.f32 %v354, %v454
    %v487 = vadd.f32 %v355, %v455
    %v488 = vld [vmem:[%s3] sm:$0xf]
    %v490 = vlaneseq
    %v491 = vshrl.u32 %v490, 7
    %v492 = vsub.s32 0, %v491
    %v493 = vrot.slane %v488, %v492
    %v494 = vlaneseq
    %v495 = vshrl.u32 %v494, 7
    %v496 = vsub.s32 1, %v495
    %v497 = vrot.slane %v488, %v496
    %v498 = vlaneseq
    %v499 = vshrl.u32 %v498, 7
    %v500 = vsub.s32 2, %v499
    %v501 = vrot.slane %v488, %v500
    %v502 = vlaneseq
    %v503 = vshrl.u32 %v502, 7
    %v504 = vsub.s32 3, %v503
    %v505 = vrot.slane %v488, %v504
    %v510 = vadd.f32 %v456, %v493
    %v511 = vadd.f32 %v457, %v497
    %v512 = vadd.f32 %v458, %v501
    %v513 = vadd.f32 %v459, %v505
    %v514 = vadd.f32 %v460, %v493
    %v515 = vadd.f32 %v461, %v497
    %v516 = vadd.f32 %v462, %v501
    %v517 = vadd.f32 %v463, %v505
    %v518 = vadd.f32 %v464, %v493
    %v519 = vadd.f32 %v465, %v497
    %v520 = vadd.f32 %v466, %v501
    %v521 = vadd.f32 %v467, %v505
    %v522 = vadd.f32 %v468, %v493
    %v523 = vadd.f32 %v469, %v497
    %v524 = vadd.f32 %v470, %v501
    %v525 = vadd.f32 %v471, %v505
    %v526 = vadd.f32 %v472, %v493
    %v527 = vadd.f32 %v473, %v497
    %v528 = vadd.f32 %v474, %v501
    %v529 = vadd.f32 %v475, %v505
    %v530 = vadd.f32 %v476, %v493
    %v531 = vadd.f32 %v477, %v497
    %v532 = vadd.f32 %v478, %v501
    %v533 = vadd.f32 %v479, %v505
    %v534 = vadd.f32 %v480, %v493
    %v535 = vadd.f32 %v481, %v497
    %v536 = vadd.f32 %v482, %v501
    %v537 = vadd.f32 %v483, %v505
    %v538 = vadd.f32 %v484, %v493
    %v539 = vadd.f32 %v485, %v497
    %v540 = vadd.f32 %v486, %v501
    %v541 = vadd.f32 %v487, %v505
    %v542 = vmax.f32 %v510, 0.0
    %v543 = vmax.f32 %v511, 0.0
    %v544 = vmax.f32 %v512, 0.0
    %v545 = vmax.f32 %v513, 0.0
    %v546 = vmax.f32 %v514, 0.0
    %v547 = vmax.f32 %v515, 0.0
    %v548 = vmax.f32 %v516, 0.0
    %v549 = vmax.f32 %v517, 0.0
    %v550 = vmax.f32 %v518, 0.0
    %v551 = vmax.f32 %v519, 0.0
    %v552 = vmax.f32 %v520, 0.0
    %v553 = vmax.f32 %v521, 0.0
    %v554 = vmax.f32 %v522, 0.0
    %v555 = vmax.f32 %v523, 0.0
    %v556 = vmax.f32 %v524, 0.0
    %v557 = vmax.f32 %v525, 0.0
    %v558 = vmax.f32 %v526, 0.0
    %v559 = vmax.f32 %v527, 0.0
    %v560 = vmax.f32 %v528, 0.0
    %v561 = vmax.f32 %v529, 0.0
    %v562 = vmax.f32 %v530, 0.0
    %v563 = vmax.f32 %v531, 0.0
    %v564 = vmax.f32 %v532, 0.0
    %v565 = vmax.f32 %v533, 0.0
    %v566 = vmax.f32 %v534, 0.0
    %v567 = vmax.f32 %v535, 0.0
    %v568 = vmax.f32 %v536, 0.0
    %v569 = vmax.f32 %v537, 0.0
    %v570 = vmax.f32 %v538, 0.0
    %v571 = vmax.f32 %v539, 0.0
    %v572 = vmax.f32 %v540, 0.0
    %v573 = vmax.f32 %v541, 0.0
    %v574 = vmax.f32 %v542, %v546
    %v575 = vmax.f32 %v574, %v550
    %v576 = vmax.f32 %v575, %v554
    %v577 = vmax.f32 %v576, %v558
    %v578 = vmax.f32 %v577, %v562
    %v579 = vmax.f32 %v578, %v566
    %v580 = vmax.f32 %v579, %v570
    %v581 = vrot.slane %v580, 4
    %v582 = vmax.f32 %v580, %v581
    %v583 = vrot.slane %v582, 2
    %v584 = vmax.f32 %v582, %v583
    %v585 = vrot.slane %v584, 1
    %v586 = vmax.f32 %v584, %v585
    %v587 = vmax.f32 %v543, %v547
    %v588 = vmax.f32 %v587, %v551
    %v589 = vmax.f32 %v588, %v555
    %v590 = vmax.f32 %v589, %v559
    %v591 = vmax.f32 %v590, %v563
    %v592 = vmax.f32 %v591, %v567
    %v593 = vmax.f32 %v592, %v571
    %v594 = vrot.slane %v593, 4
    %v595 = vmax.f32 %v593, %v594
    %v596 = vrot.slane %v595, 2
    %v597 = vmax.f32 %v595, %v596
    %v598 = vrot.slane %v597, 1
    %v599 = vmax.f32 %v597, %v598
    %v600 = vmax.f32 %v544, %v548
    %v601 = vmax.f32 %v600, %v552
    %v602 = vmax.f32 %v601, %v556
    %v603 = vmax.f32 %v602, %v560
    %v604 = vmax.f32 %v603, %v564
    %v605 = vmax.f32 %v604, %v568
    %v606 = vmax.f32 %v605, %v572
    %v607 = vrot.slane %v606, 4
    %v608 = vmax.f32 %v606, %v607
    %v609 = vrot.slane %v608, 2
    %v610 = vmax.f32 %v608, %v609
    %v611 = vrot.slane %v610, 1
    %v612 = vmax.f32 %v610, %v611
    %v613 = vmax.f32 %v545, %v549
    %v614 = vmax.f32 %v613, %v553
    %v615 = vmax.f32 %v614, %v557
    %v616 = vmax.f32 %v615, %v561
    %v617 = vmax.f32 %v616, %v565
    %v618 = vmax.f32 %v617, %v569
    %v619 = vmax.f32 %v618, %v573
    %v620 = vrot.slane %v619, 4
    %v621 = vmax.f32 %v619, %v620
    %v622 = vrot.slane %v621, 2
    %v623 = vmax.f32 %v621, %v622
    %v624 = vrot.slane %v623, 1
    %v625 = vmax.f32 %v623, %v624
    %s626 = smul.u32 4, 64
    %s627 = smul.u32 %s626, 4
    %s628 = sshll.u32 %s627, 4
    %629 = dma.done [#allocation4], %s628
    %v630 = vld [vmem:[#allocation2] sm:$0xff]
    %v631 = vld [vmem:[#allocation2 + $0x8] sm:$0xff]
    %v632 = vld [vmem:[#allocation2 + $0x10] sm:$0xff]
    %v633 = vld [vmem:[#allocation2 + $0x18] sm:$0xff]
    %v634 = vld [vmem:[#allocation2 + $0x20] sm:$0xff]
    %v635 = vld [vmem:[#allocation2 + $0x28] sm:$0xff]
    %v636 = vld [vmem:[#allocation2 + $0x30] sm:$0xff]
    %v637 = vld [vmem:[#allocation2 + $0x38] sm:$0xff]
    %v638 = vld [vmem:[#allocation2 + $0x40] sm:$0xff]
    %v639 = vld [vmem:[#allocation2 + $0x48] sm:$0xff]
    %v640 = vld [vmem:[#allocation2 + $0x50] sm:$0xff]
    %v641 = vld [vmem:[#allocation2 + $0x58] sm:$0xff]
    %v642 = vld [vmem:[#allocation2 + $0x60] sm:$0xff]
    %v643 = vld [vmem:[#allocation2 + $0x68] sm:$0xff]
    %v644 = vld [vmem:[#allocation2 + $0x70] sm:$0xff]
    %v645 = vld [vmem:[#allocation2 + $0x78] sm:$0xff]
    %v646 = vld [vmem:[#allocation2 + $0x80] sm:$0xff]
    %v647 = vld [vmem:[#allocation2 + $0x88] sm:$0xff]
    %v648 = vld [vmem:[#allocation2 + $0x90] sm:$0xff]
    %v649 = vld [vmem:[#allocation2 + $0x98] sm:$0xff]
    %v650 = vld [vmem:[#allocation2 + $0xa0] sm:$0xff]
    %v651 = vld [vmem:[#allocation2 + $0xa8] sm:$0xff]
    %v652 = vld [vmem:[#allocation2 + $0xb0] sm:$0xff]
    %v653 = vld [vmem:[#allocation2 + $0xb8] sm:$0xff]
    %v654 = vld [vmem:[#allocation2 + $0xc0] sm:$0xff]
    %v655 = vld [vmem:[#allocation2 + $0xc8] sm:$0xff]
    %v656 = vld [vmem:[#allocation2 + $0xd0] sm:$0xff]
    %v657 = vld [vmem:[#allocation2 + $0xd8] sm:$0xff]
    %v658 = vld [vmem:[#allocation2 + $0xe0] sm:$0xff]
    %v659 = vld [vmem:[#allocation2 + $0xe8] sm:$0xff]
    %v660 = vld [vmem:[#allocation2 + $0xf0] sm:$0xff]
    %v661 = vld [vmem:[#allocation2 + $0xf8] sm:$0xff]
    %v662 = vld [vmem:[#allocation2 + $0x100] sm:$0xff]
    %v663 = vld [vmem:[#allocation2 + $0x108] sm:$0xff]
    %v664 = vld [vmem:[#allocation2 + $0x110] sm:$0xff]
    %v665 = vld [vmem:[#allocation2 + $0x118] sm:$0xff]
    %v666 = vld [vmem:[#allocation2 + $0x120] sm:$0xff]
    %v667 = vld [vmem:[#allocation2 + $0x128] sm:$0xff]
    %v668 = vld [vmem:[#allocation2 + $0x130] sm:$0xff]
    %v669 = vld [vmem:[#allocation2 + $0x138] sm:$0xff]
    %v670 = vld [vmem:[#allocation2 + $0x140] sm:$0xff]
    %v671 = vld [vmem:[#allocation2 + $0x148] sm:$0xff]
    %v672 = vld [vmem:[#allocation2 + $0x150] sm:$0xff]
    %v673 = vld [vmem:[#allocation2 + $0x158] sm:$0xff]
    %v674 = vld [vmem:[#allocation2 + $0x160] sm:$0xff]
    %v675 = vld [vmem:[#allocation2 + $0x168] sm:$0xff]
    %v676 = vld [vmem:[#allocation2 + $0x170] sm:$0xff]
    %v677 = vld [vmem:[#allocation2 + $0x178] sm:$0xff]
    %v678 = vld [vmem:[#allocation2 + $0x180] sm:$0xff]
    %v679 = vld [vmem:[#allocation2 + $0x188] sm:$0xff]
    %v680 = vld [vmem:[#allocation2 + $0x190] sm:$0xff]
    %v681 = vld [vmem:[#allocation2 + $0x198] sm:$0xff]
    %v682 = vld [vmem:[#allocation2 + $0x1a0] sm:$0xff]
    %v683 = vld [vmem:[#allocation2 + $0x1a8] sm:$0xff]
    %v684 = vld [vmem:[#allocation2 + $0x1b0] sm:$0xff]
    %v685 = vld [vmem:[#allocation2 + $0x1b8] sm:$0xff]
    %v686 = vld [vmem:[#allocation2 + $0x1c0] sm:$0xff]
    %v687 = vld [vmem:[#allocation2 + $0x1c8] sm:$0xff]
    %v688 = vld [vmem:[#allocation2 + $0x1d0] sm:$0xff]
    %v689 = vld [vmem:[#allocation2 + $0x1d8] sm:$0xff]
    %v690 = vld [vmem:[#allocation2 + $0x1e0] sm:$0xff]
    %v691 = vld [vmem:[#allocation2 + $0x1e8] sm:$0xff]
    %v692 = vld [vmem:[#allocation2 + $0x1f0] sm:$0xff]
    %v693 = vld [vmem:[#allocation2 + $0x1f8] sm:$0xff]
    %v694 = vld [vmem:[#allocation2 + $0x200] sm:$0xff]
    %v695 = vld [vmem:[#allocation2 + $0x208] sm:$0xff]
    %v696 = vld [vmem:[#allocation2 + $0x210] sm:$0xff]
    %v697 = vld [vmem:[#allocation2 + $0x218] sm:$0xff]
    %v698 = vld [vmem:[#allocation2 + $0x220] sm:$0xff]
    %v699 = vld [vmem:[#allocation2 + $0x228] sm:$0xff]
    %v700 = vld [vmem:[#allocation2 + $0x230] sm:$0xff]
    %v701 = vld [vmem:[#allocation2 + $0x238] sm:$0xff]
    %v702 = vld [vmem:[#allocation2 + $0x240] sm:$0xff]
    %v703 = vld [vmem:[#allocation2 + $0x248] sm:$0xff]
    %v704 = vld [vmem:[#allocation2 + $0x250] sm:$0xff]
    %v705 = vld [vmem:[#allocation2 + $0x258] sm:$0xff]
    %v706 = vld [vmem:[#allocation2 + $0x260] sm:$0xff]
    %v707 = vld [vmem:[#allocation2 + $0x268] sm:$0xff]
    %v708 = vld [vmem:[#allocation2 + $0x270] sm:$0xff]
    %v709 = vld [vmem:[#allocation2 + $0x278] sm:$0xff]
    %v710 = vld [vmem:[#allocation2 + $0x280] sm:$0xff]
    %v711 = vld [vmem:[#allocation2 + $0x288] sm:$0xff]
    %v712 = vld [vmem:[#allocation2 + $0x290] sm:$0xff]
    %v713 = vld [vmem:[#allocation2 + $0x298] sm:$0xff]
    %v714 = vld [vmem:[#allocation2 + $0x2a0] sm:$0xff]
    %v715 = vld [vmem:[#allocation2 + $0x2a8] sm:$0xff]
    %v716 = vld [vmem:[#allocation2 + $0x2b0] sm:$0xff]
    %v717 = vld [vmem:[#allocation2 + $0x2b8] sm:$0xff]
    %v718 = vld [vmem:[#allocation2 + $0x2c0] sm:$0xff]
    %v719 = vld [vmem:[#allocation2 + $0x2c8] sm:$0xff]
    %v720 = vld [vmem:[#allocation2 + $0x2d0] sm:$0xff]
    %v721 = vld [vmem:[#allocation2 + $0x2d8] sm:$0xff]
    %v722 = vld [vmem:[#allocation2 + $0x2e0] sm:$0xff]
    %v723 = vld [vmem:[#allocation2 + $0x2e8] sm:$0xff]
    %v724 = vld [vmem:[#allocation2 + $0x2f0] sm:$0xff]
    %v725 = vld [vmem:[#allocation2 + $0x2f8] sm:$0xff]
    %v726 = vld [vmem:[#allocation2 + $0x300] sm:$0xff]
    %v727 = vld [vmem:[#allocation2 + $0x308] sm:$0xff]
    %v728 = vld [vmem:[#allocation2 + $0x310] sm:$0xff]
    %v729 = vld [vmem:[#allocation2 + $0x318] sm:$0xff]
    %v730 = vld [vmem:[#allocation2 + $0x320] sm:$0xff]
    %v731 = vld [vmem:[#allocation2 + $0x328] sm:$0xff]
    %v732 = vld [vmem:[#allocation2 + $0x330] sm:$0xff]
    %v733 = vld [vmem:[#allocation2 + $0x338] sm:$0xff]
    %v734 = vld [vmem:[#allocation2 + $0x340] sm:$0xff]
    %v735 = vld [vmem:[#allocation2 + $0x348] sm:$0xff]
    %v736 = vld [vmem:[#allocation2 + $0x350] sm:$0xff]
    %v737 = vld [vmem:[#allocation2 + $0x358] sm:$0xff]
    %v738 = vld [vmem:[#allocation2 + $0x360] sm:$0xff]
    %v739 = vld [vmem:[#allocation2 + $0x368] sm:$0xff]
    %v740 = vld [vmem:[#allocation2 + $0x370] sm:$0xff]
    %v741 = vld [vmem:[#allocation2 + $0x378] sm:$0xff]
    %v742 = vld [vmem:[#allocation2 + $0x380] sm:$0xff]
    %v743 = vld [vmem:[#allocation2 + $0x388] sm:$0xff]
    %v744 = vld [vmem:[#allocation2 + $0x390] sm:$0xff]
    %v745 = vld [vmem:[#allocation2 + $0x398] sm:$0xff]
    %v746 = vld [vmem:[#allocation2 + $0x3a0] sm:$0xff]
    %v747 = vld [vmem:[#allocation2 + $0x3a8] sm:$0xff]
    %v748 = vld [vmem:[#allocation2 + $0x3b0] sm:$0xff]
    %v749 = vld [vmem:[#allocation2 + $0x3b8] sm:$0xff]
    %v750 = vld [vmem:[#allocation2 + $0x3c0] sm:$0xff]
    %v751 = vld [vmem:[#allocation2 + $0x3c8] sm:$0xff]
    %v752 = vld [vmem:[#allocation2 + $0x3d0] sm:$0xff]
    %v753 = vld [vmem:[#allocation2 + $0x3d8] sm:$0xff]
    %v754 = vld [vmem:[#allocation2 + $0x3e0] sm:$0xff]
    %v755 = vld [vmem:[#allocation2 + $0x3e8] sm:$0xff]
    %v756 = vld [vmem:[#allocation2 + $0x3f0] sm:$0xff]
    %v757 = vld [vmem:[#allocation2 + $0x3f8] sm:$0xff]
    %v758 = vunpack.c.l.bf16 %v630
    %v759 = vunpack.c.l.bf16 %v631
    %v760 = vunpack.c.l.bf16 %v632
    %v761 = vunpack.c.l.bf16 %v633
    %v762 = vunpack.c.h.bf16 %v630
    %v763 = vunpack.c.h.bf16 %v631
    %v764 = vunpack.c.h.bf16 %v632
    %v765 = vunpack.c.h.bf16 %v633
    %v766 = vunpack.c.l.bf16 %v634
    %v767 = vunpack.c.l.bf16 %v635
    %v768 = vunpack.c.l.bf16 %v636
    %v769 = vunpack.c.l.bf16 %v637
    %v770 = vunpack.c.h.bf16 %v634
    %v771 = vunpack.c.h.bf16 %v635
    %v772 = vunpack.c.h.bf16 %v636
    %v773 = vunpack.c.h.bf16 %v637
    %v774 = vunpack.c.l.bf16 %v638
    %v775 = vunpack.c.l.bf16 %v639
    %v776 = vunpack.c.l.bf16 %v640
    %v777 = vunpack.c.l.bf16 %v641
    %v778 = vunpack.c.h.bf16 %v638
    %v779 = vunpack.c.h.bf16 %v639
    %v780 = vunpack.c.h.bf16 %v640
    %v781 = vunpack.c.h.bf16 %v641
    %v782 = vunpack.c.l.bf16 %v642
    %v783 = vunpack.c.l.bf16 %v643
    %v784 = vunpack.c.l.bf16 %v644
    %v785 = vunpack.c.l.bf16 %v645
    %v786 = vunpack.c.h.bf16 %v642
    %v787 = vunpack.c.h.bf16 %v643
    %v788 = vunpack.c.h.bf16 %v644
    %v789 = vunpack.c.h.bf16 %v645
    %v790 = vunpack.c.l.bf16 %v646
    %v791 = vunpack.c.l.bf16 %v647
    %v792 = vunpack.c.l.bf16 %v648
    %v793 = vunpack.c.l.bf16 %v649
    %v794 = vunpack.c.h.bf16 %v646
    %v795 = vunpack.c.h.bf16 %v647
    %v796 = vunpack.c.h.bf16 %v648
    %v797 = vunpack.c.h.bf16 %v649
    %v798 = vunpack.c.l.bf16 %v650
    %v799 = vunpack.c.l.bf16 %v651
    %v800 = vunpack.c.l.bf16 %v652
    %v801 = vunpack.c.l.bf16 %v653
    %v802 = vunpack.c.h.bf16 %v650
    %v803 = vunpack.c.h.bf16 %v651
    %v804 = vunpack.c.h.bf16 %v652
    %v805 = vunpack.c.h.bf16 %v653
    %v806 = vunpack.c.l.bf16 %v654
    %v807 = vunpack.c.l.bf16 %v655
    %v808 = vunpack.c.l.bf16 %v656
    %v809 = vunpack.c.l.bf16 %v657
    %v810 = vunpack.c.h.bf16 %v654
    %v811 = vunpack.c.h.bf16 %v655
    %v812 = vunpack.c.h.bf16 %v656
    %v813 = vunpack.c.h.bf16 %v657
    %v814 = vunpack.c.l.bf16 %v658
    %v815 = vunpack.c.l.bf16 %v659
    %v816 = vunpack.c.l.bf16 %v660
    %v817 = vunpack.c.l.bf16 %v661
    %v818 = vunpack.c.h.bf16 %v658
    %v819 = vunpack.c.h.bf16 %v659
    %v820 = vunpack.c.h.bf16 %v660
    %v821 = vunpack.c.h.bf16 %v661
    %v822 = vunpack.c.l.bf16 %v662
    %v823 = vunpack.c.l.bf16 %v663
    %v824 = vunpack.c.l.bf16 %v664
    %v825 = vunpack.c.l.bf16 %v665
    %v826 = vunpack.c.h.bf16 %v662
    %v827 = vunpack.c.h.bf16 %v663
    %v828 = vunpack.c.h.bf16 %v664
    %v829 = vunpack.c.h.bf16 %v665
    %v830 = vunpack.c.l.bf16 %v666
    %v831 = vunpack.c.l.bf16 %v667
    %v832 = vunpack.c.l.bf16 %v668
    %v833 = vunpack.c.l.bf16 %v669
    %v834 = vunpack.c.h.bf16 %v666
    %v835 = vunpack.c.h.bf16 %v667
    %v836 = vunpack.c.h.bf16 %v668
    %v837 = vunpack.c.h.bf16 %v669
    %v838 = vunpack.c.l.bf16 %v670
    %v839 = vunpack.c.l.bf16 %v671
    %v840 = vunpack.c.l.bf16 %v672
    %v841 = vunpack.c.l.bf16 %v673
    %v842 = vunpack.c.h.bf16 %v670
    %v843 = vunpack.c.h.bf16 %v671
    %v844 = vunpack.c.h.bf16 %v672
    %v845 = vunpack.c.h.bf16 %v673
    %v846 = vunpack.c.l.bf16 %v674
    %v847 = vunpack.c.l.bf16 %v675
    %v848 = vunpack.c.l.bf16 %v676
    %v849 = vunpack.c.l.bf16 %v677
    %v850 = vunpack.c.h.bf16 %v674
    %v851 = vunpack.c.h.bf16 %v675
    %v852 = vunpack.c.h.bf16 %v676
    %v853 = vunpack.c.h.bf16 %v677
    %v854 = vunpack.c.l.bf16 %v678
    %v855 = vunpack.c.l.bf16 %v679
    %v856 = vunpack.c.l.bf16 %v680
    %v857 = vunpack.c.l.bf16 %v681
    %v858 = vunpack.c.h.bf16 %v678
    %v859 = vunpack.c.h.bf16 %v679
    %v860 = vunpack.c.h.bf16 %v680
    %v861 = vunpack.c.h.bf16 %v681
    %v862 = vunpack.c.l.bf16 %v682
    %v863 = vunpack.c.l.bf16 %v683
    %v864 = vunpack.c.l.bf16 %v684
    %v865 = vunpack.c.l.bf16 %v685
    %v866 = vunpack.c.h.bf16 %v682
    %v867 = vunpack.c.h.bf16 %v683
    %v868 = vunpack.c.h.bf16 %v684
    %v869 = vunpack.c.h.bf16 %v685
    %v870 = vunpack.c.l.bf16 %v686
    %v871 = vunpack.c.l.bf16 %v687
    %v872 = vunpack.c.l.bf16 %v688
    %v873 = vunpack.c.l.bf16 %v689
    %v874 = vunpack.c.h.bf16 %v686
    %v875 = vunpack.c.h.bf16 %v687
    %v876 = vunpack.c.h.bf16 %v688
    %v877 = vunpack.c.h.bf16 %v689
    %v878 = vunpack.c.l.bf16 %v690
    %v879 = vunpack.c.l.bf16 %v691
    %v880 = vunpack.c.l.bf16 %v692
    %v881 = vunpack.c.l.bf16 %v693
    %v882 = vunpack.c.h.bf16 %v690
    %v883 = vunpack.c.h.bf16 %v691
    %v884 = vunpack.c.h.bf16 %v692
    %v885 = vunpack.c.h.bf16 %v693
    %v886 = vunpack.c.l.bf16 %v694
    %v887 = vunpack.c.l.bf16 %v695
    %v888 = vunpack.c.l.bf16 %v696
    %v889 = vunpack.c.l.bf16 %v697
    %v890 = vunpack.c.h.bf16 %v694
    %v891 = vunpack.c.h.bf16 %v695
    %v892 = vunpack.c.h.bf16 %v696
    %v893 = vunpack.c.h.bf16 %v697
    %v894 = vunpack.c.l.bf16 %v698
    %v895 = vunpack.c.l.bf16 %v699
    %v896 = vunpack.c.l.bf16 %v700
    %v897 = vunpack.c.l.bf16 %v701
    %v898 = vunpack.c.h.bf16 %v698
    %v899 = vunpack.c.h.bf16 %v699
    %v900 = vunpack.c.h.bf16 %v700
    %v901 = vunpack.c.h.bf16 %v701
    %v902 = vunpack.c.l.bf16 %v702
    %v903 = vunpack.c.l.bf16 %v703
    %v904 = vunpack.c.l.bf16 %v704
    %v905 = vunpack.c.l.bf16 %v705
    %v906 = vunpack.c.h.bf16 %v702
    %v907 = vunpack.c.h.bf16 %v703
    %v908 = vunpack.c.h.bf16 %v704
    %v909 = vunpack.c.h.bf16 %v705
    %v910 = vunpack.c.l.bf16 %v706
    %v911 = vunpack.c.l.bf16 %v707
    %v912 = vunpack.c.l.bf16 %v708
    %v913 = vunpack.c.l.bf16 %v709
    %v914 = vunpack.c.h.bf16 %v706
    %v915 = vunpack.c.h.bf16 %v707
    %v916 = vunpack.c.h.bf16 %v708
    %v917 = vunpack.c.h.bf16 %v709
    %v918 = vunpack.c.l.bf16 %v710
    %v919 = vunpack.c.l.bf16 %v711
    %v920 = vunpack.c.l.bf16 %v712
    %v921 = vunpack.c.l.bf16 %v713
    %v922 = vunpack.c.h.bf16 %v710
    %v923 = vunpack.c.h.bf16 %v711
    %v924 = vunpack.c.h.bf16 %v712
    %v925 = vunpack.c.h.bf16 %v713
    %v926 = vunpack.c.l.bf16 %v714
    %v927 = vunpack.c.l.bf16 %v715
    %v928 = vunpack.c.l.bf16 %v716
    %v929 = vunpack.c.l.bf16 %v717
    %v930 = vunpack.c.h.bf16 %v714
    %v931 = vunpack.c.h.bf16 %v715
    %v932 = vunpack.c.h.bf16 %v716
    %v933 = vunpack.c.h.bf16 %v717
    %v934 = vunpack.c.l.bf16 %v718
    %v935 = vunpack.c.l.bf16 %v719
    %v936 = vunpack.c.l.bf16 %v720
    %v937 = vunpack.c.l.bf16 %v721
    %v938 = vunpack.c.h.bf16 %v718
    %v939 = vunpack.c.h.bf16 %v719
    %v940 = vunpack.c.h.bf16 %v720
    %v941 = vunpack.c.h.bf16 %v721
    %v942 = vunpack.c.l.bf16 %v722
    %v943 = vunpack.c.l.bf16 %v723
    %v944 = vunpack.c.l.bf16 %v724
    %v945 = vunpack.c.l.bf16 %v725
    %v946 = vunpack.c.h.bf16 %v722
    %v947 = vunpack.c.h.bf16 %v723
    %v948 = vunpack.c.h.bf16 %v724
    %v949 = vunpack.c.h.bf16 %v725
    %v950 = vunpack.c.l.bf16 %v726
    %v951 = vunpack.c.l.bf16 %v727
    %v952 = vunpack.c.l.bf16 %v728
    %v953 = vunpack.c.l.bf16 %v729
    %v954 = vunpack.c.h.bf16 %v726
    %v955 = vunpack.c.h.bf16 %v727
    %v956 = vunpack.c.h.bf16 %v728
    %v957 = vunpack.c.h.bf16 %v729
    %v958 = vunpack.c.l.bf16 %v730
    %v959 = vunpack.c.l.bf16 %v731
    %v960 = vunpack.c.l.bf16 %v732
    %v961 = vunpack.c.l.bf16 %v733
    %v962 = vunpack.c.h.bf16 %v730
    %v963 = vunpack.c.h.bf16 %v731
    %v964 = vunpack.c.h.bf16 %v732
    %v965 = vunpack.c.h.bf16 %v733
    %v966 = vunpack.c.l.bf16 %v734
    %v967 = vunpack.c.l.bf16 %v735
    %v968 = vunpack.c.l.bf16 %v736
    %v969 = vunpack.c.l.bf16 %v737
    %v970 = vunpack.c.h.bf16 %v734
    %v971 = vunpack.c.h.bf16 %v735
    %v972 = vunpack.c.h.bf16 %v736
    %v973 = vunpack.c.h.bf16 %v737
    %v974 = vunpack.c.l.bf16 %v738
    %v975 = vunpack.c.l.bf16 %v739
    %v976 = vunpack.c.l.bf16 %v740
    %v977 = vunpack.c.l.bf16 %v741
    %v978 = vunpack.c.h.bf16 %v738
    %v979 = vunpack.c.h.bf16 %v739
    %v980 = vunpack.c.h.bf16 %v740
    %v981 = vunpack.c.h.bf16 %v741
    %v982 = vunpack.c.l.bf16 %v742
    %v983 = vunpack.c.l.bf16 %v743
    %v984 = vunpack.c.l.bf16 %v744
    %v985 = vunpack.c.l.bf16 %v745
    %v986 = vunpack.c.h.bf16 %v742
    %v987 = vunpack.c.h.bf16 %v743
    %v988 = vunpack.c.h.bf16 %v744
    %v989 = vunpack.c.h.bf16 %v745
    %v990 = vunpack.c.l.bf16 %v746
    %v991 = vunpack.c.l.bf16 %v747
    %v992 = vunpack.c.l.bf16 %v748
    %v993 = vunpack.c.l.bf16 %v749
    %v994 = vunpack.c.h.bf16 %v746
    %v995 = vunpack.c.h.bf16 %v747
    %v996 = vunpack.c.h.bf16 %v748
    %v997 = vunpack.c.h.bf16 %v749
    %v998 = vunpack.c.l.bf16 %v750
    %v999 = vunpack.c.l.bf16 %v751
    %v1000 = vunpack.c.l.bf16 %v752
    %v1001 = vunpack.c.l.bf16 %v753
    %v1002 = vunpack.c.h.bf16 %v750
    %v1003 = vunpack.c.h.bf16 %v751
    %v1004 = vunpack.c.h.bf16 %v752
    %v1005 = vunpack.c.h.bf16 %v753
    %v1006 = vunpack.c.l.bf16 %v754
    %v1007 = vunpack.c.l.bf16 %v755
    %v1008 = vunpack.c.l.bf16 %v756
    %v1009 = vunpack.c.l.bf16 %v757
    %v1010 = vunpack.c.h.bf16 %v754
    %v1011 = vunpack.c.h.bf16 %v755
    %v1012 = vunpack.c.h.bf16 %v756
    %v1013 = vunpack.c.h.bf16 %v757
    %v1014 = vld [vmem:[%s5] sm:$0xf]
    %v1016 = vlaneseq
    %v1017 = vshrl.u32 %v1016, 7
    %v1018 = vsub.s32 0, %v1017
    %v1019 = vrot.slane %v1014, %v1018
    %v1020 = vlaneseq
    %v1021 = vshrl.u32 %v1020, 7
    %v1022 = vsub.s32 1, %v1021
    %v1023 = vrot.slane %v1014, %v1022
    %v1024 = vlaneseq
    %v1025 = vshrl.u32 %v1024, 7
    %v1026 = vsub.s32 2, %v1025
    %v1027 = vrot.slane %v1014, %v1026
    %v1028 = vlaneseq
    %v1029 = vshrl.u32 %v1028, 7
    %v1030 = vsub.s32 3, %v1029
    %v1031 = vrot.slane %v1014, %v1030
    %1036 = vmatprep.subr.mxu0 %v759
    %1037 = vmatpush1.msra.mxu0 %v758
    %1038 = vmatprep.subr.mxu0 %v763
    %1039 = vmatpush1.msra.mxu0 %v762
    %1040 = vmatprep.subr.mxu0 %v767
    %1041 = vmatpush1.msra.mxu0 %v766
    %1042 = vmatprep.subr.mxu0 %v771
    %1043 = vmatpush1.msra.mxu0 %v770
    %1044 = vmatprep.subr.mxu0 %v775
    %1045 = vmatpush1.msra.mxu0 %v774
    %1046 = vmatprep.subr.mxu0 %v779
    %1047 = vmatpush1.msra.mxu0 %v778
    %1048 = vmatprep.subr.mxu0 %v783
    %1049 = vmatpush1.msra.mxu0 %v782
    %1050 = vmatprep.subr.mxu0 %v787
    %1051 = vmatpush1.msra.mxu0 %v786
    %1052 = vmatprep.subr.mxu0 %v791
    %1053 = vmatpush1.msra.mxu0 %v790
    %1054 = vmatprep.subr.mxu0 %v795
    %1055 = vmatpush1.msra.mxu0 %v794
    %1056 = vmatprep.subr.mxu0 %v799
    %1057 = vmatpush1.msra.mxu0 %v798
    %1058 = vmatprep.subr.mxu0 %v803
    %1059 = vmatpush1.msra.mxu0 %v802
    %1060 = vmatprep.subr.mxu0 %v807
    %1061 = vmatpush1.msra.mxu0 %v806
    %1062 = vmatprep.subr.mxu0 %v811
    %1063 = vmatpush1.msra.mxu0 %v810
    %1064 = vmatprep.subr.mxu0 %v815
    %1065 = vmatpush1.msra.mxu0 %v814
    %1066 = vmatprep.subr.mxu0 %v819
    %1067 = vmatpush1.msra.mxu0 %v818
    %1068 = vmatprep.subr.mxu0 %v823
    %1069 = vmatpush1.msra.mxu0 %v822
    %1070 = vmatprep.subr.mxu0 %v827
    %1071 = vmatpush1.msra.mxu0 %v826
    %1072 = vmatprep.subr.mxu0 %v831
    %1073 = vmatpush1.msra.mxu0 %v830
    %1074 = vmatprep.subr.mxu0 %v835
    %1075 = vmatpush1.msra.mxu0 %v834
    %1076 = vmatprep.subr.mxu0 %v839
    %1077 = vmatpush1.msra.mxu0 %v838
    %1078 = vmatprep.subr.mxu0 %v843
    %1079 = vmatpush1.msra.mxu0 %v842
    %1080 = vmatprep.subr.mxu0 %v847
    %1081 = vmatpush1.msra.mxu0 %v846
    %1082 = vmatprep.subr.mxu0 %v851
    %1083 = vmatpush1.msra.mxu0 %v850
    %1084 = vmatprep.subr.mxu0 %v855
    %1085 = vmatpush1.msra.mxu0 %v854
    %1086 = vmatprep.subr.mxu0 %v859
    %1087 = vmatpush1.msra.mxu0 %v858
    %1088 = vmatprep.subr.mxu0 %v863
    %1089 = vmatpush1.msra.mxu0 %v862
    %1090 = vmatprep.subr.mxu0 %v867
    %1091 = vmatpush1.msra.mxu0 %v866
    %1092 = vmatprep.subr.mxu0 %v871
    %1093 = vmatpush1.msra.mxu0 %v870
    %1094 = vmatprep.subr.mxu0 %v875
    %1095 = vmatpush1.msra.mxu0 %v874
    %1096 = vmatprep.subr.mxu0 %v879
    %1097 = vmatpush1.msra.mxu0 %v878
    %1098 = vmatprep.subr.mxu0 %v883
    %1099 = vmatpush1.msra.mxu0 %v882
    %1100 = vmatprep.mubr.f32.mxu0 %v599
    %1101 = vmatmul.mubr.f32.gmra.mrb[0].mxu0 %v586
    %v1102 = vpop.f32.mrb[0].mxu0
    %v1103 = vadd.f32 %v1019, %v1102
    %v1104 = vpop.f32.mrb[0].mxu0
    %v1105 = vadd.f32 %v1023, %v1104
    %1106 = vdwg.mxu0
    %1107 = vmatprep.subr.mxu0 %v887
    %1108 = vmatpush1.msra.mxu0 %v886
    %1109 = vmatprep.subr.mxu0 %v891
    %1110 = vmatpush1.msra.mxu0 %v890
    %1111 = vmatprep.subr.mxu0 %v895
    %1112 = vmatpush1.msra.mxu0 %v894
    %1113 = vmatprep.subr.mxu0 %v899
    %1114 = vmatpush1.msra.mxu0 %v898
    %1115 = vmatprep.subr.mxu0 %v903
    %1116 = vmatpush1.msra.mxu0 %v902
    %1117 = vmatprep.subr.mxu0 %v907
    %1118 = vmatpush1.msra.mxu0 %v906
    %1119 = vmatprep.subr.mxu0 %v911
    %1120 = vmatpush1.msra.mxu0 %v910
    %1121 = vmatprep.subr.mxu0 %v915
    %1122 = vmatpush1.msra.mxu0 %v914
    %1123 = vmatprep.subr.mxu0 %v919
    %1124 = vmatpush1.msra.mxu0 %v918
    %1125 = vmatprep.subr.mxu0 %v923
    %1126 = vmatpush1.msra.mxu0 %v922
    %1127 = vmatprep.subr.mxu0 %v927
    %1128 = vmatpush1.msra.mxu0 %v926
    %1129 = vmatprep.subr.mxu0 %v931
    %1130 = vmatpush1.msra.mxu0 %v930
    %1131 = vmatprep.subr.mxu0 %v935
    %1132 = vmatpush1.msra.mxu0 %v934
    %1133 = vmatprep.subr.mxu0 %v939
    %1134 = vmatpush1.msra.mxu0 %v938
    %1135 = vmatprep.subr.mxu0 %v943
    %1136 = vmatpush1.msra.mxu0 %v942
    %1137 = vmatprep.subr.mxu0 %v947
    %1138 = vmatpush1.msra.mxu0 %v946
    %1139 = vmatprep.subr.mxu0 %v951
    %1140 = vmatpush1.msra.mxu0 %v950
    %1141 = vmatprep.subr.mxu0 %v955
    %1142 = vmatpush1.msra.mxu0 %v954
    %1143 = vmatprep.subr.mxu0 %v959
    %1144 = vmatpush1.msra.mxu0 %v958
    %1145 = vmatprep.subr.mxu0 %v963
    %1146 = vmatpush1.msra.mxu0 %v962
    %1147 = vmatprep.subr.mxu0 %v967
    %1148 = vmatpush1.msra.mxu0 %v966
    %1149 = vmatprep.subr.mxu0 %v971
    %1150 = vmatpush1.msra.mxu0 %v970
    %1151 = vmatprep.subr.mxu0 %v975
    %1152 = vmatpush1.msra.mxu0 %v974
    %1153 = vmatprep.subr.mxu0 %v979
    %1154 = vmatpush1.msra.mxu0 %v978
    %1155 = vmatprep.subr.mxu0 %v983
    %1156 = vmatpush1.msra.mxu0 %v982
    %1157 = vmatprep.subr.mxu0 %v987
    %1158 = vmatpush1.msra.mxu0 %v986
    %1159 = vmatprep.subr.mxu0 %v991
    %1160 = vmatpush1.msra.mxu0 %v990
    %1161 = vmatprep.subr.mxu0 %v995
    %1162 = vmatpush1.msra.mxu0 %v994
    %1163 = vmatprep.subr.mxu0 %v999
    %1164 = vmatpush1.msra.mxu0 %v998
    %1165 = vmatprep.subr.mxu0 %v1003
    %1166 = vmatpush1.msra.mxu0 %v1002
    %1167 = vmatprep.subr.mxu0 %v1007
    %1168 = vmatpush1.msra.mxu0 %v1006
    %1169 = vmatprep.subr.mxu0 %v1011
    %1170 = vmatpush1.msra.mxu0 %v1010
    %1171 = vmatprep.mubr.f32.mxu0 %v625
    %1172 = vmatmul.mubr.f32.gmra.mrb[0].mxu0 %v612
    %v1173 = vpop.f32.mrb[0].mxu0
    %v1174 = vadd.f32 %v1103, %v1173
    %v1175 = vpop.f32.mrb[0].mxu0
    %v1176 = vadd.f32 %v1105, %v1175
    %1177 = vdwg.mxu0
    %1178 = vmatprep.subr.mxu0 %v761
    %1179 = vmatpush1.msra.mxu0 %v760
    %1180 = vmatprep.subr.mxu0 %v765
    %1181 = vmatpush1.msra.mxu0 %v764
    %1182 = vmatprep.subr.mxu0 %v769
    %1183 = vmatpush1.msra.mxu0 %v768
    %1184 = vmatprep.subr.mxu0 %v773
    %1185 = vmatpush1.msra.mxu0 %v772
    %1186 = vmatprep.subr.mxu0 %v777
    %1187 = vmatpush1.msra.mxu0 %v776
    %1188 = vmatprep.subr.mxu0 %v781
    %1189 = vmatpush1.msra.mxu0 %v780
    %1190 = vmatprep.subr.mxu0 %v785
    %1191 = vmatpush1.msra.mxu0 %v784
    %1192 = vmatprep.subr.mxu0 %v789
    %1193 = vmatpush1.msra.mxu0 %v788
    %1194 = vmatprep.subr.mxu0 %v793
    %1195 = vmatpush1.msra.mxu0 %v792
    %1196 = vmatprep.subr.mxu0 %v797
    %1197 = vmatpush1.msra.mxu0 %v796
    %1198 = vmatprep.subr.mxu0 %v801
    %1199 = vmatpush1.msra.mxu0 %v800
    %1200 = vmatprep.subr.mxu0 %v805
    %1201 = vmatpush1.msra.mxu0 %v804
    %1202 = vmatprep.subr.mxu0 %v809
    %1203 = vmatpush1.msra.mxu0 %v808
    %1204 = vmatprep.subr.mxu0 %v813
    %1205 = vmatpush1.msra.mxu0 %v812
    %1206 = vmatprep.subr.mxu0 %v817
    %1207 = vmatpush1.msra.mxu0 %v816
    %1208 = vmatprep.subr.mxu0 %v821
    %1209 = vmatpush1.msra.mxu0 %v820
    %1210 = vmatprep.subr.mxu0 %v825
    %1211 = vmatpush1.msra.mxu0 %v824
    %1212 = vmatprep.subr.mxu0 %v829
    %1213 = vmatpush1.msra.mxu0 %v828
    %1214 = vmatprep.subr.mxu0 %v833
    %1215 = vmatpush1.msra.mxu0 %v832
    %1216 = vmatprep.subr.mxu0 %v837
    %1217 = vmatpush1.msra.mxu0 %v836
    %1218 = vmatprep.subr.mxu0 %v841
    %1219 = vmatpush1.msra.mxu0 %v840
    %1220 = vmatprep.subr.mxu0 %v845
    %1221 = vmatpush1.msra.mxu0 %v844
    %1222 = vmatprep.subr.mxu0 %v849
    %1223 = vmatpush1.msra.mxu0 %v848
    %1224 = vmatprep.subr.mxu0 %v853
    %1225 = vmatpush1.msra.mxu0 %v852
    %1226 = vmatprep.subr.mxu0 %v857
    %1227 = vmatpush1.msra.mxu0 %v856
    %1228 = vmatprep.subr.mxu0 %v861
    %1229 = vmatpush1.msra.mxu0 %v860
    %1230 = vmatprep.subr.mxu0 %v865
    %1231 = vmatpush1.msra.mxu0 %v864
    %1232 = vmatprep.subr.mxu0 %v869
    %1233 = vmatpush1.msra.mxu0 %v868
    %1234 = vmatprep.subr.mxu0 %v873
    %1235 = vmatpush1.msra.mxu0 %v872
    %1236 = vmatprep.subr.mxu0 %v877
    %1237 = vmatpush1.msra.mxu0 %v876
    %1238 = vmatprep.subr.mxu0 %v881
    %1239 = vmatpush1.msra.mxu0 %v880
    %1240 = vmatprep.subr.mxu0 %v885
    %1241 = vmatpush1.msra.mxu0 %v884
    %1242 = vmatprep.mubr.f32.mxu0 %v599
    %1243 = vmatmul.mubr.f32.gmra.mrb[0].mxu0 %v586
    %v1244 = vpop.f32.mrb[0].mxu0
    %v1245 = vadd.f32 %v1027, %v1244
    %v1246 = vpop.f32.mrb[0].mxu0
    %v1247 = vadd.f32 %v1031, %v1246
    %1248 = vdwg.mxu0
    %1249 = vmatprep.subr.mxu0 %v889
    %1250 = vmatpush1.msra.mxu0 %v888
    %1251 = vmatprep.subr.mxu0 %v893
    %1252 = vmatpush1.msra.mxu0 %v892
    %1253 = vmatprep.subr.mxu0 %v897
    %1254 = vmatpush1.msra.mxu0 %v896
    %1255 = vmatprep.subr.mxu0 %v901
    %1256 = vmatpush1.msra.mxu0 %v900
    %1257 = vmatprep.subr.mxu0 %v905
    %1258 = vmatpush1.msra.mxu0 %v904
    %1259 = vmatprep.subr.mxu0 %v909
    %1260 = vmatpush1.msra.mxu0 %v908
    %1261 = vmatprep.subr.mxu0 %v913
    %1262 = vmatpush1.msra.mxu0 %v912
    %1263 = vmatprep.subr.mxu0 %v917
    %1264 = vmatpush1.msra.mxu0 %v916
    %1265 = vmatprep.subr.mxu0 %v921
    %1266 = vmatpush1.msra.mxu0 %v920
    %1267 = vmatprep.subr.mxu0 %v925
    %1268 = vmatpush1.msra.mxu0 %v924
    %1269 = vmatprep.subr.mxu0 %v929
    %1270 = vmatpush1.msra.mxu0 %v928
    %1271 = vmatprep.subr.mxu0 %v933
    %1272 = vmatpush1.msra.mxu0 %v932
    %1273 = vmatprep.subr.mxu0 %v937
    %1274 = vmatpush1.msra.mxu0 %v936
    %1275 = vmatprep.subr.mxu0 %v941
    %1276 = vmatpush1.msra.mxu0 %v940
    %1277 = vmatprep.subr.mxu0 %v945
    %1278 = vmatpush1.msra.mxu0 %v944
    %1279 = vmatprep.subr.mxu0 %v949
    %1280 = vmatpush1.msra.mxu0 %v948
    %1281 = vmatprep.subr.mxu0 %v953
    %1282 = vmatpush1.msra.mxu0 %v952
    %1283 = vmatprep.subr.mxu0 %v957
    %1284 = vmatpush1.msra.mxu0 %v956
    %1285 = vmatprep.subr.mxu0 %v961
    %1286 = vmatpush1.msra.mxu0 %v960
    %1287 = vmatprep.subr.mxu0 %v965
    %1288 = vmatpush1.msra.mxu0 %v964
    %1289 = vmatprep.subr.mxu0 %v969
    %1290 = vmatpush1.msra.mxu0 %v968
    %1291 = vmatprep.subr.mxu0 %v973
    %1292 = vmatpush1.msra.mxu0 %v972
    %1293 = vmatprep.subr.mxu0 %v977
    %1294 = vmatpush1.msra.mxu0 %v976
    %1295 = vmatprep.subr.mxu0 %v981
    %1296 = vmatpush1.msra.mxu0 %v980
    %1297 = vmatprep.subr.mxu0 %v985
    %1298 = vmatpush1.msra.mxu0 %v984
    %1299 = vmatprep.subr.mxu0 %v989
    %1300 = vmatpush1.msra.mxu0 %v988
    %1301 = vmatprep.subr.mxu0 %v993
    %1302 = vmatpush1.msra.mxu0 %v992
    %1303 = vmatprep.subr.mxu0 %v997
    %1304 = vmatpush1.msra.mxu0 %v996
    %1305 = vmatprep.subr.mxu0 %v1001
    %1306 = vmatpush1.msra.mxu0 %v1000
    %1307 = vmatprep.subr.mxu0 %v1005
    %1308 = vmatpush1.msra.mxu0 %v1004
    %1309 = vmatprep.subr.mxu0 %v1009
    %1310 = vmatpush1.msra.mxu0 %v1008
    %1311 = vmatprep.subr.mxu0 %v1013
    %1312 = vmatpush1.msra.mxu0 %v1012
    %1313 = vmatprep.mubr.f32.mxu0 %v625
    %1314 = vmatmul.mubr.f32.gmra.mrb[0].mxu0 %v612
    %v1315 = vpop.f32.mrb[0].mxu0
    %v1316 = vadd.f32 %v1245, %v1315
    %v1317 = vpop.f32.mrb[0].mxu0
    %v1318 = vadd.f32 %v1247, %v1317
    %1319 = vdwg.mxu0
    %v1320 = vmax.f32 %v1174, 0.0
    %v1321 = vmax.f32 %v1176, 0.0
    %v1322 = vmax.f32 %v1316, 0.0
    %v1323 = vmax.f32 %v1318, 0.0
    %s1324 = smul.u32 %s626, 2
    %s1325 = sshll.u32 %s1324, 4
    %1326 = dma.done %s69, %s1325
    %v1327 = vld [vmem:[#allocation3] sm:$0xff]
    %v1328 = vld [vmem:[#allocation3 + $0x8] sm:$0xff]
    %v1329 = vld [vmem:[#allocation3 + $0x10] sm:$0xff]
    %v1330 = vld [vmem:[#allocation3 + $0x18] sm:$0xff]
    %v1331 = vld [vmem:[#allocation3 + $0x20] sm:$0xff]
    %v1332 = vld [vmem:[#allocation3 + $0x28] sm:$0xff]
    %v1333 = vld [vmem:[#allocation3 + $0x30] sm:$0xff]
    %v1334 = vld [vmem:[#allocation3 + $0x38] sm:$0xff]
    %v1335 = vld [vmem:[#allocation3 + $0x40] sm:$0xff]
    %v1336 = vld [vmem:[#allocation3 + $0x48] sm:$0xff]
    %v1337 = vld [vmem:[#allocation3 + $0x50] sm:$0xff]
    %v1338 = vld [vmem:[#allocation3 + $0x58] sm:$0xff]
    %v1339 = vld [vmem:[#allocation3 + $0x60] sm:$0xff]
    %v1340 = vld [vmem:[#allocation3 + $0x68] sm:$0xff]
    %v1341 = vld [vmem:[#allocation3 + $0x70] sm:$0xff]
    %v1342 = vld [vmem:[#allocation3 + $0x78] sm:$0xff]
    %v1343 = vld [vmem:[#allocation3 + $0x80] sm:$0xff]
    %v1344 = vld [vmem:[#allocation3 + $0x88] sm:$0xff]
    %v1345 = vld [vmem:[#allocation3 + $0x90] sm:$0xff]
    %v1346 = vld [vmem:[#allocation3 + $0x98] sm:$0xff]
    %v1347 = vld [vmem:[#allocation3 + $0xa0] sm:$0xff]
    %v1348 = vld [vmem:[#allocation3 + $0xa8] sm:$0xff]
    %v1349 = vld [vmem:[#allocation3 + $0xb0] sm:$0xff]
    %v1350 = vld [vmem:[#allocation3 + $0xb8] sm:$0xff]
    %v1351 = vld [vmem:[#allocation3 + $0xc0] sm:$0xff]
    %v1352 = vld [vmem:[#allocation3 + $0xc8] sm:$0xff]
    %v1353 = vld [vmem:[#allocation3 + $0xd0] sm:$0xff]
    %v1354 = vld [vmem:[#allocation3 + $0xd8] sm:$0xff]
    %v1355 = vld [vmem:[#allocation3 + $0xe0] sm:$0xff]
    %v1356 = vld [vmem:[#allocation3 + $0xe8] sm:$0xff]
    %v1357 = vld [vmem:[#allocation3 + $0xf0] sm:$0xff]
    %v1358 = vld [vmem:[#allocation3 + $0xf8] sm:$0xff]
    %v1359 = vld [vmem:[#allocation3 + $0x100] sm:$0xff]
    %v1360 = vld [vmem:[#allocation3 + $0x108] sm:$0xff]
    %v1361 = vld [vmem:[#allocation3 + $0x110] sm:$0xff]
    %v1362 = vld [vmem:[#allocation3 + $0x118] sm:$0xff]
    %v1363 = vld [vmem:[#allocation3 + $0x120] sm:$0xff]
    %v1364 = vld [vmem:[#allocation3 + $0x128] sm:$0xff]
    %v1365 = vld [vmem:[#allocation3 + $0x130] sm:$0xff]
    %v1366 = vld [vmem:[#allocation3 + $0x138] sm:$0xff]
    %v1367 = vld [vmem:[#allocation3 + $0x140] sm:$0xff]
    %v1368 = vld [vmem:[#allocation3 + $0x148] sm:$0xff]
    %v1369 = vld [vmem:[#allocation3 + $0x150] sm:$0xff]
    %v1370 = vld [vmem:[#allocation3 + $0x158] sm:$0xff]
    %v1371 = vld [vmem:[#allocation3 + $0x160] sm:$0xff]
    %v1372 = vld [vmem:[#allocation3 + $0x168] sm:$0xff]
    %v1373 = vld [vmem:[#allocation3 + $0x170] sm:$0xff]
    %v1374 = vld [vmem:[#allocation3 + $0x178] sm:$0xff]
    %v1375 = vld [vmem:[#allocation3 + $0x180] sm:$0xff]
    %v1376 = vld [vmem:[#allocation3 + $0x188] sm:$0xff]
    %v1377 = vld [vmem:[#allocation3 + $0x190] sm:$0xff]
    %v1378 = vld [vmem:[#allocation3 + $0x198] sm:$0xff]
    %v1379 = vld [vmem:[#allocation3 + $0x1a0] sm:$0xff]
    %v1380 = vld [vmem:[#allocation3 + $0x1a8] sm:$0xff]
    %v1381 = vld [vmem:[#allocation3 + $0x1b0] sm:$0xff]
    %v1382 = vld [vmem:[#allocation3 + $0x1b8] sm:$0xff]
    %v1383 = vld [vmem:[#allocation3 + $0x1c0] sm:$0xff]
    %v1384 = vld [vmem:[#allocation3 + $0x1c8] sm:$0xff]
    %v1385 = vld [vmem:[#allocation3 + $0x1d0] sm:$0xff]
    %v1386 = vld [vmem:[#allocation3 + $0x1d8] sm:$0xff]
    %v1387 = vld [vmem:[#allocation3 + $0x1e0] sm:$0xff]
    %v1388 = vld [vmem:[#allocation3 + $0x1e8] sm:$0xff]
    %v1389 = vld [vmem:[#allocation3 + $0x1f0] sm:$0xff]
    %v1390 = vld [vmem:[#allocation3 + $0x1f8] sm:$0xff]
    %v1391 = vunpack.c.l.bf16 %v1327
    %v1392 = vunpack.c.l.bf16 %v1328
    %v1393 = vunpack.c.h.bf16 %v1327
    %v1394 = vunpack.c.h.bf16 %v1328
    %v1395 = vunpack.c.l.bf16 %v1329
    %v1396 = vunpack.c.l.bf16 %v1330
    %v1397 = vunpack.c.h.bf16 %v1329
    %v1398 = vunpack.c.h.bf16 %v1330
    %v1399 = vunpack.c.l.bf16 %v1331
    %v1400 = vunpack.c.l.bf16 %v1332
    %v1401 = vunpack.c.h.bf16 %v1331
    %v1402 = vunpack.c.h.bf16 %v1332
    %v1403 = vunpack.c.l.bf16 %v1333
    %v1404 = vunpack.c.l.bf16 %v1334
    %v1405 = vunpack.c.h.bf16 %v1333
    %v1406 = vunpack.c.h.bf16 %v1334
    %v1407 = vunpack.c.l.bf16 %v1335
    %v1408 = vunpack.c.l.bf16 %v1336
    %v1409 = vunpack.c.h.bf16 %v1335
    %v1410 = vunpack.c.h.bf16 %v1336
    %v1411 = vunpack.c.l.bf16 %v1337
    %v1412 = vunpack.c.l.bf16 %v1338
    %v1413 = vunpack.c.h.bf16 %v1337
    %v1414 = vunpack.c.h.bf16 %v1338
    %v1415 = vunpack.c.l.bf16 %v1339
    %v1416 = vunpack.c.l.bf16 %v1340
    %v1417 = vunpack.c.h.bf16 %v1339
    %v1418 = vunpack.c.h.bf16 %v1340
    %v1419 = vunpack.c.l.bf16 %v1341
    %v1420 = vunpack.c.l.bf16 %v1342
    %v1421 = vunpack.c.h.bf16 %v1341
    %v1422 = vunpack.c.h.bf16 %v1342
    %v1423 = vunpack.c.l.bf16 %v1343
    %v1424 = vunpack.c.l.bf16 %v1344
    %v1425 = vunpack.c.h.bf16 %v1343
    %v1426 = vunpack.c.h.bf16 %v1344
    %v1427 = vunpack.c.l.bf16 %v1345
    %v1428 = vunpack.c.l.bf16 %v1346
    %v1429 = vunpack.c.h.bf16 %v1345
    %v1430 = vunpack.c.h.bf16 %v1346
    %v1431 = vunpack.c.l.bf16 %v1347
    %v1432 = vunpack.c.l.bf16 %v1348
    %v1433 = vunpack.c.h.bf16 %v1347
    %v1434 = vunpack.c.h.bf16 %v1348
    %v1435 = vunpack.c.l.bf16 %v1349
    %v1436 = vunpack.c.l.bf16 %v1350
    %v1437 = vunpack.c.h.bf16 %v1349
    %v1438 = vunpack.c.h.bf16 %v1350
    %v1439 = vunpack.c.l.bf16 %v1351
    %v1440 = vunpack.c.l.bf16 %v1352
    %v1441 = vunpack.c.h.bf16 %v1351
    %v1442 = vunpack.c.h.bf16 %v1352
    %v1443 = vunpack.c.l.bf16 %v1353
    %v1444 = vunpack.c.l.bf16 %v1354
    %v1445 = vunpack.c.h.bf16 %v1353
    %v1446 = vunpack.c.h.bf16 %v1354
    %v1447 = vunpack.c.l.bf16 %v1355
    %v1448 = vunpack.c.l.bf16 %v1356
    %v1449 = vunpack.c.h.bf16 %v1355
    %v1450 = vunpack.c.h.bf16 %v1356
    %v1451 = vunpack.c.l.bf16 %v1357
    %v1452 = vunpack.c.l.bf16 %v1358
    %v1453 = vunpack.c.h.bf16 %v1357
    %v1454 = vunpack.c.h.bf16 %v1358
    %v1455 = vunpack.c.l.bf16 %v1359
    %v1456 = vunpack.c.l.bf16 %v1360
    %v1457 = vunpack.c.h.bf16 %v1359
    %v1458 = vunpack.c.h.bf16 %v1360
    %v1459 = vunpack.c.l.bf16 %v1361
    %v1460 = vunpack.c.l.bf16 %v1362
    %v1461 = vunpack.c.h.bf16 %v1361
    %v1462 = vunpack.c.h.bf16 %v1362
    %v1463 = vunpack.c.l.bf16 %v1363
    %v1464 = vunpack.c.l.bf16 %v1364
    %v1465 = vunpack.c.h.bf16 %v1363
    %v1466 = vunpack.c.h.bf16 %v1364
    %v1467 = vunpack.c.l.bf16 %v1365
    %v1468 = vunpack.c.l.bf16 %v1366
    %v1469 = vunpack.c.h.bf16 %v1365
    %v1470 = vunpack.c.h.bf16 %v1366
    %v1471 = vunpack.c.l.bf16 %v1367
    %v1472 = vunpack.c.l.bf16 %v1368
    %v1473 = vunpack.c.h.bf16 %v1367
    %v1474 = vunpack.c.h.bf16 %v1368
    %v1475 = vunpack.c.l.bf16 %v1369
    %v1476 = vunpack.c.l.bf16 %v1370
    %v1477 = vunpack.c.h.bf16 %v1369
    %v1478 = vunpack.c.h.bf16 %v1370
    %v1479 = vunpack.c.l.bf16 %v1371
    %v1480 = vunpack.c.l.bf16 %v1372
    %v1481 = vunpack.c.h.bf16 %v1371
    %v1482 = vunpack.c.h.bf16 %v1372
    %v1483 = vunpack.c.l.bf16 %v1373
    %v1484 = vunpack.c.l.bf16 %v1374
    %v1485 = vunpack.c.h.bf16 %v1373
    %v1486 = vunpack.c.h.bf16 %v1374
    %v1487 = vunpack.c.l.bf16 %v1375
    %v1488 = vunpack.c.l.bf16 %v1376
    %v1489 = vunpack.c.h.bf16 %v1375
    %v1490 = vunpack.c.h.bf16 %v1376
    %v1491 = vunpack.c.l.bf16 %v1377
    %v1492 = vunpack.c.l.bf16 %v1378
    %v1493 = vunpack.c.h.bf16 %v1377
    %v1494 = vunpack.c.h.bf16 %v1378
    %v1495 = vunpack.c.l.bf16 %v1379
    %v1496 = vunpack.c.l.bf16 %v1380
    %v1497 = vunpack.c.h.bf16 %v1379
    %v1498 = vunpack.c.h.bf16 %v1380
    %v1499 = vunpack.c.l.bf16 %v1381
    %v1500 = vunpack.c.l.bf16 %v1382
    %v1501 = vunpack.c.h.bf16 %v1381
    %v1502 = vunpack.c.h.bf16 %v1382
    %v1503 = vunpack.c.l.bf16 %v1383
    %v1504 = vunpack.c.l.bf16 %v1384
    %v1505 = vunpack.c.h.bf16 %v1383
    %v1506 = vunpack.c.h.bf16 %v1384
    %v1507 = vunpack.c.l.bf16 %v1385
    %v1508 = vunpack.c.l.bf16 %v1386
    %v1509 = vunpack.c.h.bf16 %v1385
    %v1510 = vunpack.c.h.bf16 %v1386
    %v1511 = vunpack.c.l.bf16 %v1387
    %v1512 = vunpack.c.l.bf16 %v1388
    %v1513 = vunpack.c.h.bf16 %v1387
    %v1514 = vunpack.c.h.bf16 %v1388
    %v1515 = vunpack.c.l.bf16 %v1389
    %v1516 = vunpack.c.l.bf16 %v1390
    %v1517 = vunpack.c.h.bf16 %v1389
    %v1518 = vunpack.c.h.bf16 %v1390
    %v1519 = vld [vmem:[%s7] sm:$0x3]
    %v1521 = vlaneseq
    %v1522 = vshrl.u32 %v1521, 7
    %v1523 = vsub.s32 0, %v1522
    %v1524 = vrot.slane %v1519, %v1523
    %v1525 = vlaneseq
    %v1526 = vshrl.u32 %v1525, 7
    %v1527 = vsub.s32 1, %v1526
    %v1528 = vrot.slane %v1519, %v1527
    %1531 = vmatprep.subr.mxu0 %v1392
    %1532 = vmatpush1.msra.mxu0 %v1391
    %1533 = vmatprep.subr.mxu0 %v1394
    %1534 = vmatpush1.msra.mxu0 %v1393
    %1535 = vmatprep.subr.mxu0 %v1396
    %1536 = vmatpush1.msra.mxu0 %v1395
    %1537 = vmatprep.subr.mxu0 %v1398
    %1538 = vmatpush1.msra.mxu0 %v1397
    %1539 = vmatprep.subr.mxu0 %v1400
    %1540 = vmatpush1.msra.mxu0 %v1399
    %1541 = vmatprep.subr.mxu0 %v1402
    %1542 = vmatpush1.msra.mxu0 %v1401
    %1543 = vmatprep.subr.mxu0 %v1404
    %1544 = vmatpush1.msra.mxu0 %v1403
    %1545 = vmatprep.subr.mxu0 %v1406
    %1546 = vmatpush1.msra.mxu0 %v1405
    %1547 = vmatprep.subr.mxu0 %v1408
    %1548 = vmatpush1.msra.mxu0 %v1407
    %1549 = vmatprep.subr.mxu0 %v1410
    %1550 = vmatpush1.msra.mxu0 %v1409
    %1551 = vmatprep.subr.mxu0 %v1412
    %1552 = vmatpush1.msra.mxu0 %v1411
    %1553 = vmatprep.subr.mxu0 %v1414
    %1554 = vmatpush1.msra.mxu0 %v1413
    %1555 = vmatprep.subr.mxu0 %v1416
    %1556 = vmatpush1.msra.mxu0 %v1415
    %1557 = vmatprep.subr.mxu0 %v1418
    %1558 = vmatpush1.msra.mxu0 %v1417
    %1559 = vmatprep.subr.mxu0 %v1420
    %1560 = vmatpush1.msra.mxu0 %v1419
    %1561 = vmatprep.subr.mxu0 %v1422
    %1562 = vmatpush1.msra.mxu0 %v1421
    %1563 = vmatprep.subr.mxu0 %v1424
    %1564 = vmatpush1.msra.mxu0 %v1423
    %1565 = vmatprep.subr.mxu0 %v1426
    %1566 = vmatpush1.msra.mxu0 %v1425
    %1567 = vmatprep.subr.mxu0 %v1428
    %1568 = vmatpush1.msra.mxu0 %v1427
    %1569 = vmatprep.subr.mxu0 %v1430
    %1570 = vmatpush1.msra.mxu0 %v1429
    %1571 = vmatprep.subr.mxu0 %v1432
    %1572 = vmatpush1.msra.mxu0 %v1431
    %1573 = vmatprep.subr.mxu0 %v1434
    %1574 = vmatpush1.msra.mxu0 %v1433
    %1575 = vmatprep.subr.mxu0 %v1436
    %1576 = vmatpush1.msra.mxu0 %v1435
    %1577 = vmatprep.subr.mxu0 %v1438
    %1578 = vmatpush1.msra.mxu0 %v1437
    %1579 = vmatprep.subr.mxu0 %v1440
    %1580 = vmatpush1.msra.mxu0 %v1439
    %1581 = vmatprep.subr.mxu0 %v1442
    %1582 = vmatpush1.msra.mxu0 %v1441
    %1583 = vmatprep.subr.mxu0 %v1444
    %1584 = vmatpush1.msra.mxu0 %v1443
    %1585 = vmatprep.subr.mxu0 %v1446
    %1586 = vmatpush1.msra.mxu0 %v1445
    %1587 = vmatprep.subr.mxu0 %v1448
    %1588 = vmatpush1.msra.mxu0 %v1447
    %1589 = vmatprep.subr.mxu0 %v1450
    %1590 = vmatpush1.msra.mxu0 %v1449
    %1591 = vmatprep.subr.mxu0 %v1452
    %1592 = vmatpush1.msra.mxu0 %v1451
    %1593 = vmatprep.subr.mxu0 %v1454
    %1594 = vmatpush1.msra.mxu0 %v1453
    %1595 = vmatprep.mubr.f32.mxu0 %v1321
    %1596 = vmatmul.mubr.f32.gmra.mrb[0].mxu0 %v1320
    %v1597 = vpop.f32.mrb[0].mxu0
    %v1598 = vadd.f32 %v1524, %v1597
    %v1599 = vpop.f32.mrb[0].mxu0
    %v1600 = vadd.f32 %v1528, %v1599
    %1601 = vdwg.mxu0
    %1602 = vmatprep.subr.mxu0 %v1456
    %1603 = vmatpush1.msra.mxu0 %v1455
    %1604 = vmatprep.subr.mxu0 %v1458
    %1605 = vmatpush1.msra.mxu0 %v1457
    %1606 = vmatprep.subr.mxu0 %v1460
    %1607 = vmatpush1.msra.mxu0 %v1459
    %1608 = vmatprep.subr.mxu0 %v1462
    %1609 = vmatpush1.msra.mxu0 %v1461
    %1610 = vmatprep.subr.mxu0 %v1464
    %1611 = vmatpush1.msra.mxu0 %v1463
    %1612 = vmatprep.subr.mxu0 %v1466
    %1613 = vmatpush1.msra.mxu0 %v1465
    %1614 = vmatprep.subr.mxu0 %v1468
    %1615 = vmatpush1.msra.mxu0 %v1467
    %1616 = vmatprep.subr.mxu0 %v1470
    %1617 = vmatpush1.msra.mxu0 %v1469
    %1618 = vmatprep.subr.mxu0 %v1472
    %1619 = vmatpush1.msra.mxu0 %v1471
    %1620 = vmatprep.subr.mxu0 %v1474
    %1621 = vmatpush1.msra.mxu0 %v1473
    %1622 = vmatprep.subr.mxu0 %v1476
    %1623 = vmatpush1.msra.mxu0 %v1475
    %1624 = vmatprep.subr.mxu0 %v1478
    %1625 = vmatpush1.msra.mxu0 %v1477
    %1626 = vmatprep.subr.mxu0 %v1480
    %1627 = vmatpush1.msra.mxu0 %v1479
    %1628 = vmatprep.subr.mxu0 %v1482
    %1629 = vmatpush1.msra.mxu0 %v1481
    %1630 = vmatprep.subr.mxu0 %v1484
    %1631 = vmatpush1.msra.mxu0 %v1483
    %1632 = vmatprep.subr.mxu0 %v1486
    %1633 = vmatpush1.msra.mxu0 %v1485
    %1634 = vmatprep.subr.mxu0 %v1488
    %1635 = vmatpush1.msra.mxu0 %v1487
    %1636 = vmatprep.subr.mxu0 %v1490
    %1637 = vmatpush1.msra.mxu0 %v1489
    %1638 = vmatprep.subr.mxu0 %v1492
    %1639 = vmatpush1.msra.mxu0 %v1491
    %1640 = vmatprep.subr.mxu0 %v1494
    %1641 = vmatpush1.msra.mxu0 %v1493
    %1642 = vmatprep.subr.mxu0 %v1496
    %1643 = vmatpush1.msra.mxu0 %v1495
    %1644 = vmatprep.subr.mxu0 %v1498
    %1645 = vmatpush1.msra.mxu0 %v1497
    %1646 = vmatprep.subr.mxu0 %v1500
    %1647 = vmatpush1.msra.mxu0 %v1499
    %1648 = vmatprep.subr.mxu0 %v1502
    %1649 = vmatpush1.msra.mxu0 %v1501
    %1650 = vmatprep.subr.mxu0 %v1504
    %1651 = vmatpush1.msra.mxu0 %v1503
    %1652 = vmatprep.subr.mxu0 %v1506
    %1653 = vmatpush1.msra.mxu0 %v1505
    %1654 = vmatprep.subr.mxu0 %v1508
    %1655 = vmatpush1.msra.mxu0 %v1507
    %1656 = vmatprep.subr.mxu0 %v1510
    %1657 = vmatpush1.msra.mxu0 %v1509
    %1658 = vmatprep.subr.mxu0 %v1512
    %1659 = vmatpush1.msra.mxu0 %v1511
    %1660 = vmatprep.subr.mxu0 %v1514
    %1661 = vmatpush1.msra.mxu0 %v1513
    %1662 = vmatprep.subr.mxu0 %v1516
    %1663 = vmatpush1.msra.mxu0 %v1515
    %1664 = vmatprep.subr.mxu0 %v1518
    %1665 = vmatpush1.msra.mxu0 %v1517
    %1666 = vmatprep.mubr.f32.mxu0 %v1323
    %1667 = vmatmul.mubr.f32.gmra.mrb[0].mxu0 %v1322
    %v1668 = vpop.f32.mrb[0].mxu0
    %v1669 = vadd.f32 %v1598, %v1668
    %v1670 = vpop.f32.mrb[0].mxu0
    %v1671 = vadd.f32 %v1600, %v1670
    %1672 = vdwg.mxu0
    %v1673 = vxor.u32 %v1669, 2147483648
    %v1674 = vxor.u32 %v1671, 2147483648
    %v1675 = vmul.f32 %v1673, 1.442695
    %v1676 = vpow.pop %v1675
    %v1677 = vmul.f32 %v1674, 1.442695
    %v1678 = vpow.pop %v1677
    %v1679 = vadd.f32 %v1676, 1.0
    %v1680 = vadd.f32 %v1678, 1.0
    %v1681 = vrcp.pop %v1679
    %v1682 = vmul.f32 1.0, %v1681
    %v1683 = vrcp.pop %v1680
    %v1684 = vmul.f32 1.0, %v1683
    %v1685 = vld [vmem:[%s8] sm:$0x3]
    %v1687 = vlaneseq
    %v1688 = vshrl.u32 %v1687, 7
    %v1689 = vsub.s32 0, %v1688
    %v1690 = vrot.slane %v1685, %v1689
    %v1691 = vlaneseq
    %v1692 = vshrl.u32 %v1691, 7
    %v1693 = vsub.s32 1, %v1692
    %v1694 = vrot.slane %v1685, %v1693
    %v1697 = vmul.f32 %v1682, %v1690
    %v1698 = vmul.f32 %v1684, %v1694
    %v1699 = vld [vmem:[%s9] sm:$0x3]
    %v1701 = vlaneseq
    %v1702 = vshrl.u32 %v1701, 7
    %v1703 = vsub.s32 0, %v1702
    %v1704 = vrot.slane %v1699, %v1703
    %v1705 = vlaneseq
    %v1706 = vshrl.u32 %v1705, 7
    %v1707 = vsub.s32 1, %v1706
    %v1708 = vrot.slane %v1699, %v1707
    %v1711 = vadd.f32 %v1697, %v1704
    %v1712 = vadd.f32 %v1698, %v1708
    %vm1713 = vcmask 253952
    %1714 = vst.msk [vmem:[#allocation5] sm:$0x1] %vm1713, %v1711
    %1716 = vrot.lane.b32.xlu0 %v1711, 96
    %v1717 = vpop.permute.xlu0 %1716
    %1719 = vst.msk [vmem:[#allocation5 + $0x1] sm:$0x1] %vm1713, %v1717
    %1720 = vrot.lane.b32.xlu0 %v1711, 64
    %v1721 = vpop.permute.xlu0 %1720
    %1723 = vst.msk [vmem:[#allocation5 + $0x2] sm:$0x1] %vm1713, %v1721
    %1724 = vrot.lane.b32.xlu0 %v1711, 32
    %v1725 = vpop.permute.xlu0 %1724
    %1727 = vst.msk [vmem:[#allocation5 + $0x3] sm:$0x1] %vm1713, %v1725
    %1728 = vst.msk [vmem:[#allocation5 + $0x4] sm:$0x1] %vm1713, %v1712
    %1730 = vrot.lane.b32.xlu0 %v1712, 96
    %v1731 = vpop.permute.xlu0 %1730
    %1733 = vst.msk [vmem:[#allocation5 + $0x5] sm:$0x1] %vm1713, %v1731
    %1734 = vrot.lane.b32.xlu0 %v1712, 64
    %v1735 = vpop.permute.xlu0 %1734
    %1737 = vst.msk [vmem:[#allocation5 + $0x6] sm:$0x1] %vm1713, %v1735
    %1738 = vrot.lane.b32.xlu0 %v1712, 32
    %v1739 = vpop.permute.xlu0 %1738
    %1741 = vst.msk [vmem:[#allocation5 + $0x7] sm:$0x1] %vm1713, %v1739
    %v1742 = vmul.f32 %v1712, %v1712
    %1744 = vrot.lane.b32.xlu0 %v1742, 96
    %v1745 = vpop.permute.xlu0 %1744
    %v1747 = vadd.f32 %v1742, %v1745
    %1748 = vrot.lane.b32.xlu0 %v1742, 64
    %v1749 = vpop.permute.xlu0 %1748
    %v1751 = vadd.f32 %v1747, %v1749
    %v1752 = vadd.f32 %v1751, 1e-08
    %v1753 = vrsqrt.pop %v1752
    %v1754 = vmul.f32 %v1712, %v1753
    %1756 = vrot.lane.b32.xlu0 %v1753, 32
    %v1757 = vpop.permute.xlu0 %1756
    %v1759 = vmul.f32 %v1712, %v1757
    %1760 = vrot.lane.b32.xlu0 %v1753, 64
    %v1761 = vpop.permute.xlu0 %1760
    %v1763 = vmul.f32 %v1712, %v1761
    %v1764 = vadd.f32 %v1712, 1e-08
    %v1765 = vrcp.pop %v1764
    %1767 = vrot.lane.b32.xlu0 %v1765, 96
    %v1768 = vpop.permute.xlu0 %1767
    %v1770 = vmul.f32 %v1711, %v1768
    %v1771 = vld [vmem:[%s1] sm:$0xff]
    %v1772 = vld [vmem:[%s1 + $0x8] sm:$0xff]
    %v1773 = vld [vmem:[%s1 + $0x10] sm:$0xff]
    %v1774 = vld [vmem:[%s1 + $0x18] sm:$0xff]
    %v1775 = vld [vmem:[%s1 + $0x20] sm:$0xff]
    %v1776 = vld [vmem:[%s1 + $0x28] sm:$0xff]
    %v1777 = vld [vmem:[%s1 + $0x30] sm:$0xff]
    %v1778 = vld [vmem:[%s1 + $0x38] sm:$0xff]
    %v1779 = vld [vmem:[%s1 + $0x40] sm:$0xff]
    %v1780 = vld [vmem:[%s1 + $0x48] sm:$0xff]
    %v1781 = vld [vmem:[%s1 + $0x50] sm:$0xff]
    %v1782 = vld [vmem:[%s1 + $0x58] sm:$0xff]
    %v1783 = vld [vmem:[%s1 + $0x60] sm:$0xff]
    %v1784 = vld [vmem:[%s1 + $0x68] sm:$0xff]
    %v1785 = vld [vmem:[%s1 + $0x70] sm:$0xff]
    %v1786 = vld [vmem:[%s1 + $0x78] sm:$0xff]
    %1788 = vset.pattern.permute.xlu0 0
    %1789 = vperm.xlu0 %1788, %v1771
    %v1790 = vpop.permute.xlu0 %1789
    %1793 = vset.pattern.permute.xlu0 0
    %1794 = vperm.xlu0 %1793, %v1772
    %v1795 = vpop.permute.xlu0 %1794
    %1798 = vset.pattern.permute.xlu0 0
    %1799 = vperm.xlu0 %1798, %v1773
    %v1800 = vpop.permute.xlu0 %1799
    %1803 = vset.pattern.permute.xlu0 0
    %1804 = vperm.xlu0 %1803, %v1774
    %v1805 = vpop.permute.xlu0 %1804
    %1808 = vset.pattern.permute.xlu0 0
    %1809 = vperm.xlu0 %1808, %v1775
    %v1810 = vpop.permute.xlu0 %1809
    %1813 = vset.pattern.permute.xlu0 0
    %1814 = vperm.xlu0 %1813, %v1776
    %v1815 = vpop.permute.xlu0 %1814
    %1818 = vset.pattern.permute.xlu0 0
    %1819 = vperm.xlu0 %1818, %v1777
    %v1820 = vpop.permute.xlu0 %1819
    %1823 = vset.pattern.permute.xlu0 0
    %1824 = vperm.xlu0 %1823, %v1778
    %v1825 = vpop.permute.xlu0 %1824
    %1828 = vset.pattern.permute.xlu0 0
    %1829 = vperm.xlu0 %1828, %v1779
    %v1830 = vpop.permute.xlu0 %1829
    %1833 = vset.pattern.permute.xlu0 0
    %1834 = vperm.xlu0 %1833, %v1780
    %v1835 = vpop.permute.xlu0 %1834
    %1838 = vset.pattern.permute.xlu0 0
    %1839 = vperm.xlu0 %1838, %v1781
    %v1840 = vpop.permute.xlu0 %1839
    %1843 = vset.pattern.permute.xlu0 0
    %1844 = vperm.xlu0 %1843, %v1782
    %v1845 = vpop.permute.xlu0 %1844
    %1848 = vset.pattern.permute.xlu0 0
    %1849 = vperm.xlu0 %1848, %v1783
    %v1850 = vpop.permute.xlu0 %1849
    %1853 = vset.pattern.permute.xlu0 0
    %1854 = vperm.xlu0 %1853, %v1784
    %v1855 = vpop.permute.xlu0 %1854
    %1858 = vset.pattern.permute.xlu0 0
    %1859 = vperm.xlu0 %1858, %v1785
    %v1860 = vpop.permute.xlu0 %1859
    %1863 = vset.pattern.permute.xlu0 0
    %1864 = vperm.xlu0 %1863, %v1786
    %v1865 = vpop.permute.xlu0 %1864
    %v1867 = vlaneseq
    %v1868 = vshrl.u32 %v1867, 7
    %v1869 = vsub.s32 0, %v1868
    %v1870 = vrot.slane %v1711, %v1869
    %v1871 = vsub.f32 %v1790, %v1870
    %v1872 = vsub.f32 %v1795, %v1870
    %v1873 = vsub.f32 %v1800, %v1870
    %v1874 = vsub.f32 %v1805, %v1870
    %v1875 = vsub.f32 %v1810, %v1870
    %v1876 = vsub.f32 %v1815, %v1870
    %v1877 = vsub.f32 %v1820, %v1870
    %v1878 = vsub.f32 %v1825, %v1870
    %v1879 = vsub.f32 %v1830, %v1870
    %v1880 = vsub.f32 %v1835, %v1870
    %v1881 = vsub.f32 %v1840, %v1870
    %v1882 = vsub.f32 %v1845, %v1870
    %v1883 = vsub.f32 %v1850, %v1870
    %v1884 = vsub.f32 %v1855, %v1870
    %v1885 = vsub.f32 %v1860, %v1870
    %v1886 = vsub.f32 %v1865, %v1870
    %1887 = vset.pattern.permute.xlu0 1
    %1888 = vperm.xlu0 %1887, %v1771
    %v1889 = vpop.permute.xlu0 %1888
    %1891 = vset.pattern.permute.xlu0 1
    %1892 = vperm.xlu0 %1891, %v1772
    %v1893 = vpop.permute.xlu0 %1892
    %1895 = vset.pattern.permute.xlu0 1
    %1896 = vperm.xlu0 %1895, %v1773
    %v1897 = vpop.permute.xlu0 %1896
    %1899 = vset.pattern.permute.xlu0 1
    %1900 = vperm.xlu0 %1899, %v1774
    %v1901 = vpop.permute.xlu0 %1900
    %1903 = vset.pattern.permute.xlu0 1
    %1904 = vperm.xlu0 %1903, %v1775
    %v1905 = vpop.permute.xlu0 %1904
    %1907 = vset.pattern.permute.xlu0 1
    %1908 = vperm.xlu0 %1907, %v1776
    %v1909 = vpop.permute.xlu0 %1908
    %1911 = vset.pattern.permute.xlu0 1
    %1912 = vperm.xlu0 %1911, %v1777
    %v1913 = vpop.permute.xlu0 %1912
    %1915 = vset.pattern.permute.xlu0 1
    %1916 = vperm.xlu0 %1915, %v1778
    %v1917 = vpop.permute.xlu0 %1916
    %1919 = vset.pattern.permute.xlu0 1
    %1920 = vperm.xlu0 %1919, %v1779
    %v1921 = vpop.permute.xlu0 %1920
    %1923 = vset.pattern.permute.xlu0 1
    %1924 = vperm.xlu0 %1923, %v1780
    %v1925 = vpop.permute.xlu0 %1924
    %1927 = vset.pattern.permute.xlu0 1
    %1928 = vperm.xlu0 %1927, %v1781
    %v1929 = vpop.permute.xlu0 %1928
    %1931 = vset.pattern.permute.xlu0 1
    %1932 = vperm.xlu0 %1931, %v1782
    %v1933 = vpop.permute.xlu0 %1932
    %1935 = vset.pattern.permute.xlu0 1
    %1936 = vperm.xlu0 %1935, %v1783
    %v1937 = vpop.permute.xlu0 %1936
    %1939 = vset.pattern.permute.xlu0 1
    %1940 = vperm.xlu0 %1939, %v1784
    %v1941 = vpop.permute.xlu0 %1940
    %1943 = vset.pattern.permute.xlu0 1
    %1944 = vperm.xlu0 %1943, %v1785
    %v1945 = vpop.permute.xlu0 %1944
    %1947 = vset.pattern.permute.xlu0 1
    %1948 = vperm.xlu0 %1947, %v1786
    %v1949 = vpop.permute.xlu0 %1948
    %v1951 = vsub.f32 %v1889, %v1870
    %v1952 = vsub.f32 %v1893, %v1870
    %v1953 = vsub.f32 %v1897, %v1870
    %v1954 = vsub.f32 %v1901, %v1870
    %v1955 = vsub.f32 %v1905, %v1870
    %v1956 = vsub.f32 %v1909, %v1870
    %v1957 = vsub.f32 %v1913, %v1870
    %v1958 = vsub.f32 %v1917, %v1870
    %v1959 = vsub.f32 %v1921, %v1870
    %v1960 = vsub.f32 %v1925, %v1870
    %v1961 = vsub.f32 %v1929, %v1870
    %v1962 = vsub.f32 %v1933, %v1870
    %v1963 = vsub.f32 %v1937, %v1870
    %v1964 = vsub.f32 %v1941, %v1870
    %v1965 = vsub.f32 %v1945, %v1870
    %v1966 = vsub.f32 %v1949, %v1870
    %1967 = vset.pattern.permute.xlu0 2
    %1968 = vperm.xlu0 %1967, %v1771
    %v1969 = vpop.permute.xlu0 %1968
    %1971 = vset.pattern.permute.xlu0 2
    %1972 = vperm.xlu0 %1971, %v1772
    %v1973 = vpop.permute.xlu0 %1972
    %1975 = vset.pattern.permute.xlu0 2
    %1976 = vperm.xlu0 %1975, %v1773
    %v1977 = vpop.permute.xlu0 %1976
    %1979 = vset.pattern.permute.xlu0 2
    %1980 = vperm.xlu0 %1979, %v1774
    %v1981 = vpop.permute.xlu0 %1980
    %1983 = vset.pattern.permute.xlu0 2
    %1984 = vperm.xlu0 %1983, %v1775
    %v1985 = vpop.permute.xlu0 %1984
    %1987 = vset.pattern.permute.xlu0 2
    %1988 = vperm.xlu0 %1987, %v1776
    %v1989 = vpop.permute.xlu0 %1988
    %1991 = vset.pattern.permute.xlu0 2
    %1992 = vperm.xlu0 %1991, %v1777
    %v1993 = vpop.permute.xlu0 %1992
    %1995 = vset.pattern.permute.xlu0 2
    %1996 = vperm.xlu0 %1995, %v1778
    %v1997 = vpop.permute.xlu0 %1996
    %1999 = vset.pattern.permute.xlu0 2
    %2000 = vperm.xlu0 %1999, %v1779
    %v2001 = vpop.permute.xlu0 %2000
    %2003 = vset.pattern.permute.xlu0 2
    %2004 = vperm.xlu0 %2003, %v1780
    %v2005 = vpop.permute.xlu0 %2004
    %2007 = vset.pattern.permute.xlu0 2
    %2008 = vperm.xlu0 %2007, %v1781
    %v2009 = vpop.permute.xlu0 %2008
    %2011 = vset.pattern.permute.xlu0 2
    %2012 = vperm.xlu0 %2011, %v1782
    %v2013 = vpop.permute.xlu0 %2012
    %2015 = vset.pattern.permute.xlu0 2
    %2016 = vperm.xlu0 %2015, %v1783
    %v2017 = vpop.permute.xlu0 %2016
    %2019 = vset.pattern.permute.xlu0 2
    %2020 = vperm.xlu0 %2019, %v1784
    %v2021 = vpop.permute.xlu0 %2020
    %2023 = vset.pattern.permute.xlu0 2
    %2024 = vperm.xlu0 %2023, %v1785
    %v2025 = vpop.permute.xlu0 %2024
    %2027 = vset.pattern.permute.xlu0 2
    %2028 = vperm.xlu0 %2027, %v1786
    %v2029 = vpop.permute.xlu0 %2028
    %v2031 = vsub.f32 %v1969, %v1870
    %v2032 = vsub.f32 %v1973, %v1870
    %v2033 = vsub.f32 %v1977, %v1870
    %v2034 = vsub.f32 %v1981, %v1870
    %v2035 = vsub.f32 %v1985, %v1870
    %v2036 = vsub.f32 %v1989, %v1870
    %v2037 = vsub.f32 %v1993, %v1870
    %v2038 = vsub.f32 %v1997, %v1870
    %v2039 = vsub.f32 %v2001, %v1870
    %v2040 = vsub.f32 %v2005, %v1870
    %v2041 = vsub.f32 %v2009, %v1870
    %v2042 = vsub.f32 %v2013, %v1870
    %v2043 = vsub.f32 %v2017, %v1870
    %v2044 = vsub.f32 %v2021, %v1870
    %v2045 = vsub.f32 %v2025, %v1870
    %v2046 = vsub.f32 %v2029, %v1870
    %v2047 = vlaneseq
    %v2048 = vshrl.u32 %v2047, 7
    %v2049 = vsub.s32 0, %v2048
    %v2050 = vrot.slane %v1754, %v2049
    %2052 = vrot.lane.b32.xlu0 %v2050, 96
    %v2053 = vpop.permute.xlu0 %2052
    %v2055 = vmul.f32 %v1871, %v2053
    %v2056 = vmul.f32 %v1872, %v2053
    %v2057 = vmul.f32 %v1873, %v2053
    %v2058 = vmul.f32 %v1874, %v2053
    %v2059 = vmul.f32 %v1875, %v2053
    %v2060 = vmul.f32 %v1876, %v2053
    %v2061 = vmul.f32 %v1877, %v2053
    %v2062 = vmul.f32 %v1878, %v2053
    %v2063 = vmul.f32 %v1879, %v2053
    %v2064 = vmul.f32 %v1880, %v2053
    %v2065 = vmul.f32 %v1881, %v2053
    %v2066 = vmul.f32 %v1882, %v2053
    %v2067 = vmul.f32 %v1883, %v2053
    %v2068 = vmul.f32 %v1884, %v2053
    %v2069 = vmul.f32 %v1885, %v2053
    %v2070 = vmul.f32 %v1886, %v2053
    %v2071 = vlaneseq
    %v2072 = vshrl.u32 %v2071, 7
    %v2073 = vsub.s32 0, %v2072
    %v2074 = vrot.slane %v1759, %v2073
    %2076 = vrot.lane.b32.xlu0 %v2074, 96
    %v2077 = vpop.permute.xlu0 %2076
    %v2079 = vmul.f32 %v1951, %v2077
    %v2080 = vmul.f32 %v1952, %v2077
    %v2081 = vmul.f32 %v1953, %v2077
    %v2082 = vmul.f32 %v1954, %v2077
    %v2083 = vmul.f32 %v1955, %v2077
    %v2084 = vmul.f32 %v1956, %v2077
    %v2085 = vmul.f32 %v1957, %v2077
    %v2086 = vmul.f32 %v1958, %v2077
    %v2087 = vmul.f32 %v1959, %v2077
    %v2088 = vmul.f32 %v1960, %v2077
    %v2089 = vmul.f32 %v1961, %v2077
    %v2090 = vmul.f32 %v1962, %v2077
    %v2091 = vmul.f32 %v1963, %v2077
    %v2092 = vmul.f32 %v1964, %v2077
    %v2093 = vmul.f32 %v1965, %v2077
    %v2094 = vmul.f32 %v1966, %v2077
    %2111 = vrot.lane.b32.xlu0 %v2079, 96
    %v2112 = vpop.permute.xlu0 %2111
    %2113 = vrot.lane.b32.xlu0 %v2080, 96
    %v2114 = vpop.permute.xlu0 %2113
    %2115 = vrot.lane.b32.xlu0 %v2081, 96
    %v2116 = vpop.permute.xlu0 %2115
    %2117 = vrot.lane.b32.xlu0 %v2082, 96
    %v2118 = vpop.permute.xlu0 %2117
    %2119 = vrot.lane.b32.xlu0 %v2083, 96
    %v2120 = vpop.permute.xlu0 %2119
    %2121 = vrot.lane.b32.xlu0 %v2084, 96
    %v2122 = vpop.permute.xlu0 %2121
    %2123 = vrot.lane.b32.xlu0 %v2085, 96
    %v2124 = vpop.permute.xlu0 %2123
    %2125 = vrot.lane.b32.xlu0 %v2086, 96
    %v2126 = vpop.permute.xlu0 %2125
    %2127 = vrot.lane.b32.xlu0 %v2087, 96
    %v2128 = vpop.permute.xlu0 %2127
    %2129 = vrot.lane.b32.xlu0 %v2088, 96
    %v2130 = vpop.permute.xlu0 %2129
    %2131 = vrot.lane.b32.xlu0 %v2089, 96
    %v2132 = vpop.permute.xlu0 %2131
    %2133 = vrot.lane.b32.xlu0 %v2090, 96
    %v2134 = vpop.permute.xlu0 %2133
    %2135 = vrot.lane.b32.xlu0 %v2091, 96
    %v2136 = vpop.permute.xlu0 %2135
    %2137 = vrot.lane.b32.xlu0 %v2092, 96
    %v2138 = vpop.permute.xlu0 %2137
    %2139 = vrot.lane.b32.xlu0 %v2093, 96
    %v2140 = vpop.permute.xlu0 %2139
    %2141 = vrot.lane.b32.xlu0 %v2094, 96
    %v2142 = vpop.permute.xlu0 %2141
    %v2159 = vadd.f32 %v2055, %v2112
    %v2160 = vadd.f32 %v2056, %v2114
    %v2161 = vadd.f32 %v2057, %v2116
    %v2162 = vadd.f32 %v2058, %v2118
    %v2163 = vadd.f32 %v2059, %v2120
    %v2164 = vadd.f32 %v2060, %v2122
    %v2165 = vadd.f32 %v2061, %v2124
    %v2166 = vadd.f32 %v2062, %v2126
    %v2167 = vadd.f32 %v2063, %v2128
    %v2168 = vadd.f32 %v2064, %v2130
    %v2169 = vadd.f32 %v2065, %v2132
    %v2170 = vadd.f32 %v2066, %v2134
    %v2171 = vadd.f32 %v2067, %v2136
    %v2172 = vadd.f32 %v2068, %v2138
    %v2173 = vadd.f32 %v2069, %v2140
    %v2174 = vadd.f32 %v2070, %v2142
    %v2175 = vlaneseq
    %v2176 = vshrl.u32 %v2175, 7
    %v2177 = vsub.s32 0, %v2176
    %v2178 = vrot.slane %v1763, %v2177
    %2180 = vrot.lane.b32.xlu0 %v2178, 96
    %v2181 = vpop.permute.xlu0 %2180
    %v2183 = vmul.f32 %v2031, %v2181
    %v2184 = vmul.f32 %v2032, %v2181
    %v2185 = vmul.f32 %v2033, %v2181
    %v2186 = vmul.f32 %v2034, %v2181
    %v2187 = vmul.f32 %v2035, %v2181
    %v2188 = vmul.f32 %v2036, %v2181
    %v2189 = vmul.f32 %v2037, %v2181
    %v2190 = vmul.f32 %v2038, %v2181
    %v2191 = vmul.f32 %v2039, %v2181
    %v2192 = vmul.f32 %v2040, %v2181
    %v2193 = vmul.f32 %v2041, %v2181
    %v2194 = vmul.f32 %v2042, %v2181
    %v2195 = vmul.f32 %v2043, %v2181
    %v2196 = vmul.f32 %v2044, %v2181
    %v2197 = vmul.f32 %v2045, %v2181
    %v2198 = vmul.f32 %v2046, %v2181
    %2215 = vrot.lane.b32.xlu0 %v2183, 64
    %v2216 = vpop.permute.xlu0 %2215
    %2217 = vrot.lane.b32.xlu0 %v2184, 64
    %v2218 = vpop.permute.xlu0 %2217
    %2219 = vrot.lane.b32.xlu0 %v2185, 64
    %v2220 = vpop.permute.xlu0 %2219
    %2221 = vrot.lane.b32.xlu0 %v2186, 64
    %v2222 = vpop.permute.xlu0 %2221
    %2223 = vrot.lane.b32.xlu0 %v2187, 64
    %v2224 = vpop.permute.xlu0 %2223
    %2225 = vrot.lane.b32.xlu0 %v2188, 64
    %v2226 = vpop.permute.xlu0 %2225
    %2227 = vrot.lane.b32.xlu0 %v2189, 64
    %v2228 = vpop.permute.xlu0 %2227
    %2229 = vrot.lane.b32.xlu0 %v2190, 64
    %v2230 = vpop.permute.xlu0 %2229
    %2231 = vrot.lane.b32.xlu0 %v2191, 64
    %v2232 = vpop.permute.xlu0 %2231
    %2233 = vrot.lane.b32.xlu0 %v2192, 64
    %v2234 = vpop.permute.xlu0 %2233
    %2235 = vrot.lane.b32.xlu0 %v2193, 64
    %v2236 = vpop.permute.xlu0 %2235
    %2237 = vrot.lane.b32.xlu0 %v2194, 64
    %v2238 = vpop.permute.xlu0 %2237
    %2239 = vrot.lane.b32.xlu0 %v2195, 64
    %v2240 = vpop.permute.xlu0 %2239
    %2241 = vrot.lane.b32.xlu0 %v2196, 64
    %v2242 = vpop.permute.xlu0 %2241
    %2243 = vrot.lane.b32.xlu0 %v2197, 64
    %v2244 = vpop.permute.xlu0 %2243
    %2245 = vrot.lane.b32.xlu0 %v2198, 64
    %v2246 = vpop.permute.xlu0 %2245
    %v2263 = vadd.f32 %v2159, %v2216
    %v2264 = vadd.f32 %v2160, %v2218
    %v2265 = vadd.f32 %v2161, %v2220
    %v2266 = vadd.f32 %v2162, %v2222
    %v2267 = vadd.f32 %v2163, %v2224
    %v2268 = vadd.f32 %v2164, %v2226
    %v2269 = vadd.f32 %v2165, %v2228
    %v2270 = vadd.f32 %v2166, %v2230
    %v2271 = vadd.f32 %v2167, %v2232
    %v2272 = vadd.f32 %v2168, %v2234
    %v2273 = vadd.f32 %v2169, %v2236
    %v2274 = vadd.f32 %v2170, %v2238
    %v2275 = vadd.f32 %v2171, %v2240
    %v2276 = vadd.f32 %v2172, %v2242
    %v2277 = vadd.f32 %v2173, %v2244
    %v2278 = vadd.f32 %v2174, %v2246
    %v2279 = vmul.f32 %v1871, %v1871
    %v2280 = vmul.f32 %v1872, %v1872
    %v2281 = vmul.f32 %v1873, %v1873
    %v2282 = vmul.f32 %v1874, %v1874
    %v2283 = vmul.f32 %v1875, %v1875
    %v2284 = vmul.f32 %v1876, %v1876
    %v2285 = vmul.f32 %v1877, %v1877
    %v2286 = vmul.f32 %v1878, %v1878
    %v2287 = vmul.f32 %v1879, %v1879
    %v2288 = vmul.f32 %v1880, %v1880
    %v2289 = vmul.f32 %v1881, %v1881
    %v2290 = vmul.f32 %v1882, %v1882
    %v2291 = vmul.f32 %v1883, %v1883
    %v2292 = vmul.f32 %v1884, %v1884
    %v2293 = vmul.f32 %v1885, %v1885
    %v2294 = vmul.f32 %v1886, %v1886
    %v2295 = vmul.f32 %v1951, %v1951
    %v2296 = vmul.f32 %v1952, %v1952
    %v2297 = vmul.f32 %v1953, %v1953
    %v2298 = vmul.f32 %v1954, %v1954
    %v2299 = vmul.f32 %v1955, %v1955
    %v2300 = vmul.f32 %v1956, %v1956
    %v2301 = vmul.f32 %v1957, %v1957
    %v2302 = vmul.f32 %v1958, %v1958
    %v2303 = vmul.f32 %v1959, %v1959
    %v2304 = vmul.f32 %v1960, %v1960
    %v2305 = vmul.f32 %v1961, %v1961
    %v2306 = vmul.f32 %v1962, %v1962
    %v2307 = vmul.f32 %v1963, %v1963
    %v2308 = vmul.f32 %v1964, %v1964
    %v2309 = vmul.f32 %v1965, %v1965
    %v2310 = vmul.f32 %v1966, %v1966
    %2327 = vrot.lane.b32.xlu0 %v2295, 96
    %v2328 = vpop.permute.xlu0 %2327
    %2329 = vrot.lane.b32.xlu0 %v2296, 96
    %v2330 = vpop.permute.xlu0 %2329
    %2331 = vrot.lane.b32.xlu0 %v2297, 96
    %v2332 = vpop.permute.xlu0 %2331
    %2333 = vrot.lane.b32.xlu0 %v2298, 96
    %v2334 = vpop.permute.xlu0 %2333
    %2335 = vrot.lane.b32.xlu0 %v2299, 96
    %v2336 = vpop.permute.xlu0 %2335
    %2337 = vrot.lane.b32.xlu0 %v2300, 96
    %v2338 = vpop.permute.xlu0 %2337
    %2339 = vrot.lane.b32.xlu0 %v2301, 96
    %v2340 = vpop.permute.xlu0 %2339
    %2341 = vrot.lane.b32.xlu0 %v2302, 96
    %v2342 = vpop.permute.xlu0 %2341
    %2343 = vrot.lane.b32.xlu0 %v2303, 96
    %v2344 = vpop.permute.xlu0 %2343
    %2345 = vrot.lane.b32.xlu0 %v2304, 96
    %v2346 = vpop.permute.xlu0 %2345
    %2347 = vrot.lane.b32.xlu0 %v2305, 96
    %v2348 = vpop.permute.xlu0 %2347
    %2349 = vrot.lane.b32.xlu0 %v2306, 96
    %v2350 = vpop.permute.xlu0 %2349
    %2351 = vrot.lane.b32.xlu0 %v2307, 96
    %v2352 = vpop.permute.xlu0 %2351
    %2353 = vrot.lane.b32.xlu0 %v2308, 96
    %v2354 = vpop.permute.xlu0 %2353
    %2355 = vrot.lane.b32.xlu0 %v2309, 96
    %v2356 = vpop.permute.xlu0 %2355
    %2357 = vrot.lane.b32.xlu0 %v2310, 96
    %v2358 = vpop.permute.xlu0 %2357
    %v2375 = vadd.f32 %v2279, %v2328
    %v2376 = vadd.f32 %v2280, %v2330
    %v2377 = vadd.f32 %v2281, %v2332
    %v2378 = vadd.f32 %v2282, %v2334
    %v2379 = vadd.f32 %v2283, %v2336
    %v2380 = vadd.f32 %v2284, %v2338
    %v2381 = vadd.f32 %v2285, %v2340
    %v2382 = vadd.f32 %v2286, %v2342
    %v2383 = vadd.f32 %v2287, %v2344
    %v2384 = vadd.f32 %v2288, %v2346
    %v2385 = vadd.f32 %v2289, %v2348
    %v2386 = vadd.f32 %v2290, %v2350
    %v2387 = vadd.f32 %v2291, %v2352
    %v2388 = vadd.f32 %v2292, %v2354
    %v2389 = vadd.f32 %v2293, %v2356
    %v2390 = vadd.f32 %v2294, %v2358
    %v2391 = vmul.f32 %v2031, %v2031
    %v2392 = vmul.f32 %v2032, %v2032
    %v2393 = vmul.f32 %v2033, %v2033
    %v2394 = vmul.f32 %v2034, %v2034
    %v2395 = vmul.f32 %v2035, %v2035
    %v2396 = vmul.f32 %v2036, %v2036
    %v2397 = vmul.f32 %v2037, %v2037
    %v2398 = vmul.f32 %v2038, %v2038
    %v2399 = vmul.f32 %v2039, %v2039
    %v2400 = vmul.f32 %v2040, %v2040
    %v2401 = vmul.f32 %v2041, %v2041
    %v2402 = vmul.f32 %v2042, %v2042
    %v2403 = vmul.f32 %v2043, %v2043
    %v2404 = vmul.f32 %v2044, %v2044
    %v2405 = vmul.f32 %v2045, %v2045
    %v2406 = vmul.f32 %v2046, %v2046
    %2423 = vrot.lane.b32.xlu0 %v2391, 64
    %v2424 = vpop.permute.xlu0 %2423
    %2425 = vrot.lane.b32.xlu0 %v2392, 64
    %v2426 = vpop.permute.xlu0 %2425
    %2427 = vrot.lane.b32.xlu0 %v2393, 64
    %v2428 = vpop.permute.xlu0 %2427
    %2429 = vrot.lane.b32.xlu0 %v2394, 64
    %v2430 = vpop.permute.xlu0 %2429
    %2431 = vrot.lane.b32.xlu0 %v2395, 64
    %v2432 = vpop.permute.xlu0 %2431
    %2433 = vrot.lane.b32.xlu0 %v2396, 64
    %v2434 = vpop.permute.xlu0 %2433
    %2435 = vrot.lane.b32.xlu0 %v2397, 64
    %v2436 = vpop.permute.xlu0 %2435
    %2437 = vrot.lane.b32.xlu0 %v2398, 64
    %v2438 = vpop.permute.xlu0 %2437
    %2439 = vrot.lane.b32.xlu0 %v2399, 64
    %v2440 = vpop.permute.xlu0 %2439
    %2441 = vrot.lane.b32.xlu0 %v2400, 64
    %v2442 = vpop.permute.xlu0 %2441
    %2443 = vrot.lane.b32.xlu0 %v2401, 64
    %v2444 = vpop.permute.xlu0 %2443
    %2445 = vrot.lane.b32.xlu0 %v2402, 64
    %v2446 = vpop.permute.xlu0 %2445
    %2447 = vrot.lane.b32.xlu0 %v2403, 64
    %v2448 = vpop.permute.xlu0 %2447
    %2449 = vrot.lane.b32.xlu0 %v2404, 64
    %v2450 = vpop.permute.xlu0 %2449
    %2451 = vrot.lane.b32.xlu0 %v2405, 64
    %v2452 = vpop.permute.xlu0 %2451
    %2453 = vrot.lane.b32.xlu0 %v2406, 64
    %v2454 = vpop.permute.xlu0 %2453
    %v2471 = vadd.f32 %v2375, %v2424
    %v2472 = vadd.f32 %v2376, %v2426
    %v2473 = vadd.f32 %v2377, %v2428
    %v2474 = vadd.f32 %v2378, %v2430
    %v2475 = vadd.f32 %v2379, %v2432
    %v2476 = vadd.f32 %v2380, %v2434
    %v2477 = vadd.f32 %v2381, %v2436
    %v2478 = vadd.f32 %v2382, %v2438
    %v2479 = vadd.f32 %v2383, %v2440
    %v2480 = vadd.f32 %v2384, %v2442
    %v2481 = vadd.f32 %v2385, %v2444
    %v2482 = vadd.f32 %v2386, %v2446
    %v2483 = vadd.f32 %v2387, %v2448
    %v2484 = vadd.f32 %v2388, %v2450
    %v2485 = vadd.f32 %v2389, %v2452
    %v2486 = vadd.f32 %v2390, %v2454
    %v2487 = vmul.f32 %v2263, %v2263
    %v2488 = vmul.f32 %v2264, %v2264
    %v2489 = vmul.f32 %v2265, %v2265
    %v2490 = vmul.f32 %v2266, %v2266
    %v2491 = vmul.f32 %v2267, %v2267
    %v2492 = vmul.f32 %v2268, %v2268
    %v2493 = vmul.f32 %v2269, %v2269
    %v2494 = vmul.f32 %v2270, %v2270
    %v2495 = vmul.f32 %v2271, %v2271
    %v2496 = vmul.f32 %v2272, %v2272
    %v2497 = vmul.f32 %v2273, %v2273
    %v2498 = vmul.f32 %v2274, %v2274
    %v2499 = vmul.f32 %v2275, %v2275
    %v2500 = vmul.f32 %v2276, %v2276
    %v2501 = vmul.f32 %v2277, %v2277
    %v2502 = vmul.f32 %v2278, %v2278
    %v2503 = vsub.f32 %v2471, %v2487
    %v2504 = vsub.f32 %v2472, %v2488
    %v2505 = vsub.f32 %v2473, %v2489
    %v2506 = vsub.f32 %v2474, %v2490
    %v2507 = vsub.f32 %v2475, %v2491
    %v2508 = vsub.f32 %v2476, %v2492
    %v2509 = vsub.f32 %v2477, %v2493
    %v2510 = vsub.f32 %v2478, %v2494
    %v2511 = vsub.f32 %v2479, %v2495
    %v2512 = vsub.f32 %v2480, %v2496
    %v2513 = vsub.f32 %v2481, %v2497
    %v2514 = vsub.f32 %v2482, %v2498
    %v2515 = vsub.f32 %v2483, %v2499
    %v2516 = vsub.f32 %v2484, %v2500
    %v2517 = vsub.f32 %v2485, %v2501
    %v2518 = vsub.f32 %v2486, %v2502
    %v2519 = vmax.f32 %v2503, 0.0
    %v2520 = vmax.f32 %v2504, 0.0
    %v2521 = vmax.f32 %v2505, 0.0
    %v2522 = vmax.f32 %v2506, 0.0
    %v2523 = vmax.f32 %v2507, 0.0
    %v2524 = vmax.f32 %v2508, 0.0
    %v2525 = vmax.f32 %v2509, 0.0
    %v2526 = vmax.f32 %v2510, 0.0
    %v2527 = vmax.f32 %v2511, 0.0
    %v2528 = vmax.f32 %v2512, 0.0
    %v2529 = vmax.f32 %v2513, 0.0
    %v2530 = vmax.f32 %v2514, 0.0
    %v2531 = vmax.f32 %v2515, 0.0
    %v2532 = vmax.f32 %v2516, 0.0
    %v2533 = vmax.f32 %v2517, 0.0
    %v2534 = vmax.f32 %v2518, 0.0
    %v2535 = vrsqrt.pop %v2519
    %v2536 = vmul.f32 %v2519, %v2535
    %vm2537 = vcmp.eq.f32.partialorder %v2519, inf
    %v2538 = vsel %vm2537, %v2519, %v2536
    %vm2539 = vcmp.eq.f32.partialorder %v2519, 0.0
    %v2540 = vand.u32 %v2519, 2147483648
    %v2541 = vsel %vm2539, %v2540, %v2538
    %v2542 = vrsqrt.pop %v2520
    %v2543 = vmul.f32 %v2520, %v2542
    %vm2544 = vcmp.eq.f32.partialorder %v2520, inf
    %v2545 = vsel %vm2544, %v2520, %v2543
    %vm2546 = vcmp.eq.f32.partialorder %v2520, 0.0
    %v2547 = vand.u32 %v2520, 2147483648
    %v2548 = vsel %vm2546, %v2547, %v2545
    %v2549 = vrsqrt.pop %v2521
    %v2550 = vmul.f32 %v2521, %v2549
    %vm2551 = vcmp.eq.f32.partialorder %v2521, inf
    %v2552 = vsel %vm2551, %v2521, %v2550
    %vm2553 = vcmp.eq.f32.partialorder %v2521, 0.0
    %v2554 = vand.u32 %v2521, 2147483648
    %v2555 = vsel %vm2553, %v2554, %v2552
    %v2556 = vrsqrt.pop %v2522
    %v2557 = vmul.f32 %v2522, %v2556
    %vm2558 = vcmp.eq.f32.partialorder %v2522, inf
    %v2559 = vsel %vm2558, %v2522, %v2557
    %vm2560 = vcmp.eq.f32.partialorder %v2522, 0.0
    %v2561 = vand.u32 %v2522, 2147483648
    %v2562 = vsel %vm2560, %v2561, %v2559
    %v2563 = vrsqrt.pop %v2523
    %v2564 = vmul.f32 %v2523, %v2563
    %vm2565 = vcmp.eq.f32.partialorder %v2523, inf
    %v2566 = vsel %vm2565, %v2523, %v2564
    %vm2567 = vcmp.eq.f32.partialorder %v2523, 0.0
    %v2568 = vand.u32 %v2523, 2147483648
    %v2569 = vsel %vm2567, %v2568, %v2566
    %v2570 = vrsqrt.pop %v2524
    %v2571 = vmul.f32 %v2524, %v2570
    %vm2572 = vcmp.eq.f32.partialorder %v2524, inf
    %v2573 = vsel %vm2572, %v2524, %v2571
    %vm2574 = vcmp.eq.f32.partialorder %v2524, 0.0
    %v2575 = vand.u32 %v2524, 2147483648
    %v2576 = vsel %vm2574, %v2575, %v2573
    %v2577 = vrsqrt.pop %v2525
    %v2578 = vmul.f32 %v2525, %v2577
    %vm2579 = vcmp.eq.f32.partialorder %v2525, inf
    %v2580 = vsel %vm2579, %v2525, %v2578
    %vm2581 = vcmp.eq.f32.partialorder %v2525, 0.0
    %v2582 = vand.u32 %v2525, 2147483648
    %v2583 = vsel %vm2581, %v2582, %v2580
    %v2584 = vrsqrt.pop %v2526
    %v2585 = vmul.f32 %v2526, %v2584
    %vm2586 = vcmp.eq.f32.partialorder %v2526, inf
    %v2587 = vsel %vm2586, %v2526, %v2585
    %vm2588 = vcmp.eq.f32.partialorder %v2526, 0.0
    %v2589 = vand.u32 %v2526, 2147483648
    %v2590 = vsel %vm2588, %v2589, %v2587
    %v2591 = vrsqrt.pop %v2527
    %v2592 = vmul.f32 %v2527, %v2591
    %vm2593 = vcmp.eq.f32.partialorder %v2527, inf
    %v2594 = vsel %vm2593, %v2527, %v2592
    %vm2595 = vcmp.eq.f32.partialorder %v2527, 0.0
    %v2596 = vand.u32 %v2527, 2147483648
    %v2597 = vsel %vm2595, %v2596, %v2594
    %v2598 = vrsqrt.pop %v2528
    %v2599 = vmul.f32 %v2528, %v2598
    %vm2600 = vcmp.eq.f32.partialorder %v2528, inf
    %v2601 = vsel %vm2600, %v2528, %v2599
    %vm2602 = vcmp.eq.f32.partialorder %v2528, 0.0
    %v2603 = vand.u32 %v2528, 2147483648
    %v2604 = vsel %vm2602, %v2603, %v2601
    %v2605 = vrsqrt.pop %v2529
    %v2606 = vmul.f32 %v2529, %v2605
    %vm2607 = vcmp.eq.f32.partialorder %v2529, inf
    %v2608 = vsel %vm2607, %v2529, %v2606
    %vm2609 = vcmp.eq.f32.partialorder %v2529, 0.0
    %v2610 = vand.u32 %v2529, 2147483648
    %v2611 = vsel %vm2609, %v2610, %v2608
    %v2612 = vrsqrt.pop %v2530
    %v2613 = vmul.f32 %v2530, %v2612
    %vm2614 = vcmp.eq.f32.partialorder %v2530, inf
    %v2615 = vsel %vm2614, %v2530, %v2613
    %vm2616 = vcmp.eq.f32.partialorder %v2530, 0.0
    %v2617 = vand.u32 %v2530, 2147483648
    %v2618 = vsel %vm2616, %v2617, %v2615
    %v2619 = vrsqrt.pop %v2531
    %v2620 = vmul.f32 %v2531, %v2619
    %vm2621 = vcmp.eq.f32.partialorder %v2531, inf
    %v2622 = vsel %vm2621, %v2531, %v2620
    %vm2623 = vcmp.eq.f32.partialorder %v2531, 0.0
    %v2624 = vand.u32 %v2531, 2147483648
    %v2625 = vsel %vm2623, %v2624, %v2622
    %v2626 = vrsqrt.pop %v2532
    %v2627 = vmul.f32 %v2532, %v2626
    %vm2628 = vcmp.eq.f32.partialorder %v2532, inf
    %v2629 = vsel %vm2628, %v2532, %v2627
    %vm2630 = vcmp.eq.f32.partialorder %v2532, 0.0
    %v2631 = vand.u32 %v2532, 2147483648
    %v2632 = vsel %vm2630, %v2631, %v2629
    %v2633 = vrsqrt.pop %v2533
    %v2634 = vmul.f32 %v2533, %v2633
    %vm2635 = vcmp.eq.f32.partialorder %v2533, inf
    %v2636 = vsel %vm2635, %v2533, %v2634
    %vm2637 = vcmp.eq.f32.partialorder %v2533, 0.0
    %v2638 = vand.u32 %v2533, 2147483648
    %v2639 = vsel %vm2637, %v2638, %v2636
    %v2640 = vrsqrt.pop %v2534
    %v2641 = vmul.f32 %v2534, %v2640
    %vm2642 = vcmp.eq.f32.partialorder %v2534, inf
    %v2643 = vsel %vm2642, %v2534, %v2641
    %vm2644 = vcmp.eq.f32.partialorder %v2534, 0.0
    %v2645 = vand.u32 %v2534, 2147483648
    %v2646 = vsel %vm2644, %v2645, %v2643
    %v2647 = vlaneseq
    %v2648 = vshrl.u32 %v2647, 7
    %v2649 = vsub.s32 0, %v2648
    %v2650 = vrot.slane %v1770, %v2649
    %2667 = vrot.lane.b32.xlu0 %v2263, 96
    %v2668 = vpop.permute.xlu0 %2667
    %2669 = vrot.lane.b32.xlu0 %v2264, 96
    %v2670 = vpop.permute.xlu0 %2669
    %2671 = vrot.lane.b32.xlu0 %v2265, 96
    %v2672 = vpop.permute.xlu0 %2671
    %2673 = vrot.lane.b32.xlu0 %v2266, 96
    %v2674 = vpop.permute.xlu0 %2673
    %2675 = vrot.lane.b32.xlu0 %v2267, 96
    %v2676 = vpop.permute.xlu0 %2675
    %2677 = vrot.lane.b32.xlu0 %v2268, 96
    %v2678 = vpop.permute.xlu0 %2677
    %2679 = vrot.lane.b32.xlu0 %v2269, 96
    %v2680 = vpop.permute.xlu0 %2679
    %2681 = vrot.lane.b32.xlu0 %v2270, 96
    %v2682 = vpop.permute.xlu0 %2681
    %2683 = vrot.lane.b32.xlu0 %v2271, 96
    %v2684 = vpop.permute.xlu0 %2683
    %2685 = vrot.lane.b32.xlu0 %v2272, 96
    %v2686 = vpop.permute.xlu0 %2685
    %2687 = vrot.lane.b32.xlu0 %v2273, 96
    %v2688 = vpop.permute.xlu0 %2687
    %2689 = vrot.lane.b32.xlu0 %v2274, 96
    %v2690 = vpop.permute.xlu0 %2689
    %2691 = vrot.lane.b32.xlu0 %v2275, 96
    %v2692 = vpop.permute.xlu0 %2691
    %2693 = vrot.lane.b32.xlu0 %v2276, 96
    %v2694 = vpop.permute.xlu0 %2693
    %2695 = vrot.lane.b32.xlu0 %v2277, 96
    %v2696 = vpop.permute.xlu0 %2695
    %2697 = vrot.lane.b32.xlu0 %v2278, 96
    %v2698 = vpop.permute.xlu0 %2697
    %v2715 = vmul.f32 %v2650, %v2668
    %v2716 = vmul.f32 %v2650, %v2670
    %v2717 = vmul.f32 %v2650, %v2672
    %v2718 = vmul.f32 %v2650, %v2674
    %v2719 = vmul.f32 %v2650, %v2676
    %v2720 = vmul.f32 %v2650, %v2678
    %v2721 = vmul.f32 %v2650, %v2680
    %v2722 = vmul.f32 %v2650, %v2682
    %v2723 = vmul.f32 %v2650, %v2684
    %v2724 = vmul.f32 %v2650, %v2686
    %v2725 = vmul.f32 %v2650, %v2688
    %v2726 = vmul.f32 %v2650, %v2690
    %v2727 = vmul.f32 %v2650, %v2692
    %v2728 = vmul.f32 %v2650, %v2694
    %v2729 = vmul.f32 %v2650, %v2696
    %v2730 = vmul.f32 %v2650, %v2698
    %v2731 = vsub.f32 %v1870, %v2715
    %v2732 = vsub.f32 %v1870, %v2716
    %v2733 = vsub.f32 %v1870, %v2717
    %v2734 = vsub.f32 %v1870, %v2718
    %v2735 = vsub.f32 %v1870, %v2719
    %v2736 = vsub.f32 %v1870, %v2720
    %v2737 = vsub.f32 %v1870, %v2721
    %v2738 = vsub.f32 %v1870, %v2722
    %v2739 = vsub.f32 %v1870, %v2723
    %v2740 = vsub.f32 %v1870, %v2724
    %v2741 = vsub.f32 %v1870, %v2725
    %v2742 = vsub.f32 %v1870, %v2726
    %v2743 = vsub.f32 %v1870, %v2727
    %v2744 = vsub.f32 %v1870, %v2728
    %v2745 = vsub.f32 %v1870, %v2729
    %v2746 = vsub.f32 %v1870, %v2730
    %2763 = vrot.lane.b32.xlu0 %v2731, 32
    %v2764 = vpop.permute.xlu0 %2763
    %2765 = vrot.lane.b32.xlu0 %v2732, 32
    %v2766 = vpop.permute.xlu0 %2765
    %2767 = vrot.lane.b32.xlu0 %v2733, 32
    %v2768 = vpop.permute.xlu0 %2767
    %2769 = vrot.lane.b32.xlu0 %v2734, 32
    %v2770 = vpop.permute.xlu0 %2769
    %2771 = vrot.lane.b32.xlu0 %v2735, 32
    %v2772 = vpop.permute.xlu0 %2771
    %2773 = vrot.lane.b32.xlu0 %v2736, 32
    %v2774 = vpop.permute.xlu0 %2773
    %2775 = vrot.lane.b32.xlu0 %v2737, 32
    %v2776 = vpop.permute.xlu0 %2775
    %2777 = vrot.lane.b32.xlu0 %v2738, 32
    %v2778 = vpop.permute.xlu0 %2777
    %2779 = vrot.lane.b32.xlu0 %v2739, 32
    %v2780 = vpop.permute.xlu0 %2779
    %2781 = vrot.lane.b32.xlu0 %v2740, 32
    %v2782 = vpop.permute.xlu0 %2781
    %2783 = vrot.lane.b32.xlu0 %v2741, 32
    %v2784 = vpop.permute.xlu0 %2783
    %2785 = vrot.lane.b32.xlu0 %v2742, 32
    %v2786 = vpop.permute.xlu0 %2785
    %2787 = vrot.lane.b32.xlu0 %v2743, 32
    %v2788 = vpop.permute.xlu0 %2787
    %2789 = vrot.lane.b32.xlu0 %v2744, 32
    %v2790 = vpop.permute.xlu0 %2789
    %2791 = vrot.lane.b32.xlu0 %v2745, 32
    %v2792 = vpop.permute.xlu0 %2791
    %2793 = vrot.lane.b32.xlu0 %v2746, 32
    %v2794 = vpop.permute.xlu0 %2793
    %v2811 = vsub.f32 %v2541, %v2764
    %v2812 = vsub.f32 %v2548, %v2766
    %v2813 = vsub.f32 %v2555, %v2768
    %v2814 = vsub.f32 %v2562, %v2770
    %v2815 = vsub.f32 %v2569, %v2772
    %v2816 = vsub.f32 %v2576, %v2774
    %v2817 = vsub.f32 %v2583, %v2776
    %v2818 = vsub.f32 %v2590, %v2778
    %v2819 = vsub.f32 %v2597, %v2780
    %v2820 = vsub.f32 %v2604, %v2782
    %v2821 = vsub.f32 %v2611, %v2784
    %v2822 = vsub.f32 %v2618, %v2786
    %v2823 = vsub.f32 %v2625, %v2788
    %v2824 = vsub.f32 %v2632, %v2790
    %v2825 = vsub.f32 %v2639, %v2792
    %v2826 = vsub.f32 %v2646, %v2794
    %v2827 = vand.u32 2147483647, %v2263
    %v2828 = vand.u32 2147483647, %v2264
    %v2829 = vand.u32 2147483647, %v2265
    %v2830 = vand.u32 2147483647, %v2266
    %v2831 = vand.u32 2147483647, %v2267
    %v2832 = vand.u32 2147483647, %v2268
    %v2833 = vand.u32 2147483647, %v2269
    %v2834 = vand.u32 2147483647, %v2270
    %v2835 = vand.u32 2147483647, %v2271
    %v2836 = vand.u32 2147483647, %v2272
    %v2837 = vand.u32 2147483647, %v2273
    %v2838 = vand.u32 2147483647, %v2274
    %v2839 = vand.u32 2147483647, %v2275
    %v2840 = vand.u32 2147483647, %v2276
    %v2841 = vand.u32 2147483647, %v2277
    %v2842 = vand.u32 2147483647, %v2278
    %v2843 = vlaneseq
    %v2844 = vshrl.u32 %v2843, 7
    %v2845 = vsub.s32 0, %v2844
    %v2846 = vrot.slane %v1712, %v2845
    %v2847 = vsub.f32 %v2827, %v2846
    %v2848 = vsub.f32 %v2828, %v2846
    %v2849 = vsub.f32 %v2829, %v2846
    %v2850 = vsub.f32 %v2830, %v2846
    %v2851 = vsub.f32 %v2831, %v2846
    %v2852 = vsub.f32 %v2832, %v2846
    %v2853 = vsub.f32 %v2833, %v2846
    %v2854 = vsub.f32 %v2834, %v2846
    %v2855 = vsub.f32 %v2835, %v2846
    %v2856 = vsub.f32 %v2836, %v2846
    %v2857 = vsub.f32 %v2837, %v2846
    %v2858 = vsub.f32 %v2838, %v2846
    %v2859 = vsub.f32 %v2839, %v2846
    %v2860 = vsub.f32 %v2840, %v2846
    %v2861 = vsub.f32 %v2841, %v2846
    %v2862 = vsub.f32 %v2842, %v2846
    %v2863 = vmax.f32 %v2811, %v2847
    %v2864 = vmax.f32 %v2812, %v2848
    %v2865 = vmax.f32 %v2813, %v2849
    %v2866 = vmax.f32 %v2814, %v2850
    %v2867 = vmax.f32 %v2815, %v2851
    %v2868 = vmax.f32 %v2816, %v2852
    %v2869 = vmax.f32 %v2817, %v2853
    %v2870 = vmax.f32 %v2818, %v2854
    %v2871 = vmax.f32 %v2819, %v2855
    %v2872 = vmax.f32 %v2820, %v2856
    %v2873 = vmax.f32 %v2821, %v2857
    %v2874 = vmax.f32 %v2822, %v2858
    %v2875 = vmax.f32 %v2823, %v2859
    %v2876 = vmax.f32 %v2824, %v2860
    %v2877 = vmax.f32 %v2825, %v2861
    %v2878 = vmax.f32 %v2826, %v2862
    %vm2879 = vcmask 261120
    %2880 = vst.msk [vmem:[%s10] sm:$0xff] %vm2879, %v2863
    %2881 = vst.msk [vmem:[%s10 + $0x8] sm:$0xff] %vm2879, %v2864
    %2882 = vst.msk [vmem:[%s10 + $0x10] sm:$0xff] %vm2879, %v2865
    %2883 = vst.msk [vmem:[%s10 + $0x18] sm:$0xff] %vm2879, %v2866
    %2884 = vst.msk [vmem:[%s10 + $0x20] sm:$0xff] %vm2879, %v2867
    %2885 = vst.msk [vmem:[%s10 + $0x28] sm:$0xff] %vm2879, %v2868
    %2886 = vst.msk [vmem:[%s10 + $0x30] sm:$0xff] %vm2879, %v2869
    %2887 = vst.msk [vmem:[%s10 + $0x38] sm:$0xff] %vm2879, %v2870
    %2888 = vst.msk [vmem:[%s10 + $0x40] sm:$0xff] %vm2879, %v2871
    %2889 = vst.msk [vmem:[%s10 + $0x48] sm:$0xff] %vm2879, %v2872
    %2890 = vst.msk [vmem:[%s10 + $0x50] sm:$0xff] %vm2879, %v2873
    %2891 = vst.msk [vmem:[%s10 + $0x58] sm:$0xff] %vm2879, %v2874
    %2892 = vst.msk [vmem:[%s10 + $0x60] sm:$0xff] %vm2879, %v2875
    %2893 = vst.msk [vmem:[%s10 + $0x68] sm:$0xff] %vm2879, %v2876
    %2894 = vst.msk [vmem:[%s10 + $0x70] sm:$0xff] %vm2879, %v2877
    %2895 = vst.msk [vmem:[%s10 + $0x78] sm:$0xff] %vm2879, %v2878
    // Predicated region
    $region34: #{cone_net_forward.1} parent=1 // pred_check
      _
    $region35: #{cone_net_forward.1} parent=1 // pred_check_branch
      %2897 = sbr.rel (0) target = $region37
    $region36: #{cone_net_forward.1} parent=1 // pred_region
      _
    $region37: #{cone_net_forward.1} parent=1 // pred_fallthru
      _
    // Predicated region
    $region38: #{cone_net_forward.1} parent=1 // pred_check
      _
    $region39: #{cone_net_forward.1} parent=1 // pred_check_branch
      %2899 = sbr.rel (0) target = $region41
    $region40: #{cone_net_forward.1} parent=1 // pred_region
      %s2901 = ssub.s32 128, 128
      %2902 = vsyncadd [#allocation6], %s2901
      %s2904 = sshll.u32 [#allocation5], 4
      %s2905 = int_to_ptr.vmem [resolvable:$true] %s2904
      %2907 = dma.vmem_to_hbm [thread:$0]  %s2905, 128, %s11, [#allocation6]
    $region41: #{cone_net_forward.1} parent=1 // pred_fallthru
      _
    // Predicated region
    $region42: #{cone_net_forward.1} parent=1 // pred_check
      _
    $region43: #{cone_net_forward.1} parent=1 // pred_check_branch
      %2909 = sbr.rel (0) target = $region45
    $region44: #{cone_net_forward.1} parent=1 // pred_region
      _
    $region45: #{cone_net_forward.1} parent=1 // pred_fallthru
      _
    // Predicated region
    $region46: #{cone_net_forward.1} parent=1 // pred_check
      _
    $region47: #{cone_net_forward.1} parent=1 // pred_check_branch
      %2911 = sbr.rel (0) target = $region49
    $region48: #{cone_net_forward.1} parent=1 // pred_region
      %2912 = dma.done [#allocation6], 128
    $region49: #{cone_net_forward.1} parent=1 // pred_fallthru
      _
    %2913 = vsyncpa [#allocation6], 1
  %2914 = vsyncmov [#allocation4]
  %s2915 = vpop.sfrf %2914
  %p2916 = scmp.eq.s32.totalorder %s2915, 0
  %p2917 = pneg %p2916
  %2919 = shalt.err (%p2917)
  %s2920 = scalar_lea.sflag [#allocation4], 1
  %2921 = vsyncmov %s2920
  %s2922 = vpop.sfrf %2921
  %p2923 = scmp.eq.s32.totalorder %s2922, 0
  %p2924 = pneg %p2923
  %2926 = shalt.err (%p2924)

</llo_original>
